<compile_context>
chip_gen: v5e
topology: v5e:2x2
jax: 0.10.0
libtpu: 0.0.40
codegen_flags: <defaults>
</compile_context>

<pallas_src>
import numpy as np
import jax
import jax.numpy as jnp
from jax.experimental import pallas as pl
from jax.experimental.pallas import tpu as pltpu


def _prelu(x):
    # nn.PReLU() default single weight = 0.25 (max form: 1 fewer VPU op).
    # Runs in bf16 (exact for alpha=0.25).
    return jnp.maximum(x, 0.25 * x)


def _round_up(x, m):
    return ((x + m - 1) // m) * m


def _node_o_kernel(f_ref,
                   w1_ref,
                   w2_ref, b2_ref,
                   w3_ref, b3_ref,
                   w56_1_ref,
                   w56_2_ref, b56_2_ref,
                   wl_ref, bl_ref,
                   out_ref):
    f32 = jnp.float32
    bf16 = jnp.bfloat16

    f = f_ref[...]                                                   # (TM,16) bf16

    # mlp1..4 first layer (1-in / 2-in branch folded into W1);
    # bias folded into W1 row 13 (F column 13 == 1.0) -> no bias add.
    h1 = _prelu(jnp.dot(f, w1_ref[...],
                        preferred_element_type=f32).astype(bf16))   # (TM,512)

    # mlp1..4 second layer, 4x (128->64) block-diagonal
    h2 = _prelu(jnp.dot(h1, w2_ref[...],
                        preferred_element_type=f32).astype(bf16)
                + b2_ref[...])                                       # (TM,256)

    # mlp1..4 third layer (64->1), 4 heads; col 4 carries a constant 1.0
    # (via b3) used to fold the next layer's bias.
    ok = _prelu(jnp.dot(h2, w3_ref[...],
                        preferred_element_type=f32).astype(bf16)
                + b3_ref[...])                                       # (TM,8)

    # mlp5/mlp6 first layer (4->128 each), side-by-side; bias folded into
    # W56_1 row 4 (ok column 4 == 1.0) -> no bias add.
    u1 = _prelu(jnp.dot(ok, w56_1_ref[...],
                        preferred_element_type=f32).astype(bf16))    # (TM,256)

    # mlp5/mlp6 second layer (128->64 each), block-diagonal
    u2 = _prelu(jnp.dot(u1, w56_2_ref[...],
                        preferred_element_type=f32).astype(bf16)
                + b56_2_ref[...])                                    # (TM,128)

    # final heads: cols 0..63 = mlp6 64-d output, col 64 = mlp5 scalar,
    # cols 65..127 = 0.  Single unmasked lane-dense bf16 (TM,128) store.
    out_ref[...] = _prelu(jnp.dot(u2, wl_ref[...],
                                  preferred_element_type=f32).astype(bf16)
                          + bl_ref[...])


# ----------------------------------------------------------------------------
# parameter synthesis (deterministic, mirrors the per-MLP torch layout)
# ----------------------------------------------------------------------------
def _uniform(key, shape, fan_in):
    bound = 1.0 / float(np.sqrt(fan_in))
    return jax.random.uniform(key, shape, jnp.float32, -bound, bound)


def init_params(key):
    ks = iter(jax.random.split(key, 32))
    p = {}
    # mlp1..4 first layer: 1-input variant (dis > 12) and 2-input variant
    p["w1_one"] = _uniform(next(ks), (4, 128), 1)
    p["b1_one"] = _uniform(next(ks), (4, 128), 1)
    p["w1_two_a"] = _uniform(next(ks), (4, 128), 2)
    p["w1_two_b"] = _uniform(next(ks), (4, 128), 2)
    p["b1_two"] = _uniform(next(ks), (4, 128), 2)
    # mlp1..4 layers 2 and 3 (128 -> 64 -> 1)
    p["w2"] = _uniform(next(ks), (4, 128, 64), 128)
    p["b2"] = _uniform(next(ks), (4, 64), 128)
    p["w3"] = _uniform(next(ks), (4, 64), 64)
    p["b3"] = _uniform(next(ks), (4,), 64)
    # mlp5: 4 -> 128 -> 64 -> 1
    p["w5_1"] = _uniform(next(ks), (4, 128), 4)
    p["b5_1"] = _uniform(next(ks), (1, 128), 4)
    p["w5_2"] = _uniform(next(ks), (128, 64), 128)
    p["b5_2"] = _uniform(next(ks), (1, 64), 128)
    p["w5_3"] = _uniform(next(ks), (1, 64), 64)
    p["b5_3"] = _uniform(next(ks), (1,), 64)
    # mlp6: 4 -> 128 -> 64 -> 64
    p["w6_1"] = _uniform(next(ks), (4, 128), 4)
    p["b6_1"] = _uniform(next(ks), (1, 128), 4)
    p["w6_2"] = _uniform(next(ks), (128, 64), 128)
    p["b6_2"] = _uniform(next(ks), (1, 64), 128)
    p["w6_3"] = _uniform(next(ks), (64, 64), 64)
    p["b6_3"] = _uniform(next(ks), (1, 64), 64)
    return p


def pack_params(p):
    """Fuse per-MLP weights into the block-diagonal matrices the kernel uses.
    All matmul operands (weights AND biases) are bf16; accumulation is f32."""
    f32, bf16 = jnp.float32, jnp.bfloat16

    # layer 1: F(TM,16) @ W1(16,512).  F columns:
    #  0..3  : [px, py, v1, ang1]            (self features)
    #  4..7  : same * mask                   (two-input delta weights)
    #  8..11 : [rx, ry, v2, ang2] * mask     (neighbor features)
    #  12    : mask                          (bias delta)
    #  13    : 1.0                           (folded 1-input bias)
    #  14..15: zero padding
    W1 = jnp.zeros((16, 512), f32)
    for k in range(4):
        col = slice(128 * k, 128 * (k + 1))
        W1 = W1.at[k, col].set(p["w1_one"][k])
        W1 = W1.at[4 + k, col].set(p["w1_two_a"][k] - p["w1_one"][k])
        W1 = W1.at[8 + k, col].set(p["w1_two_b"][k])
        W1 = W1.at[12, col].set(p["b1_two"][k] - p["b1_one"][k])
        W1 = W1.at[13, col].set(p["b1_one"][k])

    # layer 2: 4x (128->64) block-diagonal
    W2 = jnp.zeros((512, 256), f32)
    for k in range(4):
        W2 = W2.at[128 * k:128 * (k + 1), 64 * k:64 * (k + 1)].set(p["w2"][k])
    b2 = p["b2"].reshape(1, 256)

    # layer 3: 4x (64->1) heads -> columns 0..3 (padded to 8);
    # b3 column 4 = 1.0 so ok[:,4] == 1 after PReLU (used to fold b56_1).
    W3 = jnp.zeros((256, 8), f32)
    for k in range(4):
        W3 = W3.at[64 * k:64 * (k + 1), k].set(p["w3"][k])
    b3 = jnp.zeros((1, 8), f32).at[0, :4].set(p["b3"]).at[0, 4].set(1.0)

    # mlp5/mlp6 first layer: (4->128) each, side by side; biases folded into
    # row 4 (multiplied by the constant-1 column of ok).
    W56_1 = jnp.zeros((8, 256), f32)
    W56_1 = W56_1.at[:4, :128].set(p["w5_1"])
    W56_1 = W56_1.at[:4, 128:].set(p["w6_1"])
    W56_1 = W56_1.at[4, :128].set(p["b5_1"][0])
    W56_1 = W56_1.at[4, 128:].set(p["b6_1"][0])

    # mlp5/mlp6 second layer: (128->64) each, block-diagonal
    W56_2 = jnp.zeros((256, 128), f32)
    W56_2 = W56_2.at[:128, :64].set(p["w5_2"])
    W56_2 = W56_2.at[128:, 64:].set(p["w6_2"])
    b56_2 = jnp.concatenate([p["b5_2"], p["b6_2"]], axis=1)          # (1, 128)

    # final heads: cols 0..63 = mlp6 (64->64), col 64 = mlp5 (64->1)
    Wl = jnp.zeros((128, 128), f32)
    Wl = Wl.at[64:, :64].set(p["w6_3"])
    Wl = Wl.at[:64, 64].set(p["w5_3"][0])
    bl = jnp.zeros((1, 128), f32)
    bl = bl.at[0, :64].set(p["b6_3"][0])
    bl = bl.at[0, 64].set(p["b5_3"][0])

    return dict(
        W1=W1.astype(bf16),
        W2=W2.astype(bf16), b2=b2.astype(bf16),
        W3=W3.astype(bf16), b3=b3.astype(bf16),
        W56_1=W56_1.astype(bf16),
        W56_2=W56_2.astype(bf16), b56_2=b56_2.astype(bf16),
        Wl=Wl.astype(bf16), bl=bl.astype(bf16),
    )


_PARAM_ORDER = ["W1", "W2", "b2", "W3", "b3",
                "W56_1", "W56_2", "b56_2", "Wl", "bl"]


# ----------------------------------------------------------------------------
# forward
# ----------------------------------------------------------------------------
def node_o_forward(a, params, *, tm=2048):
    a = jnp.asarray(a, jnp.float32)
    T, N, _ = a.shape
    cur = a[1:]                                # a[q]     for q = 1..T-1
    prev = a[:-1]                              # a[q-1]
    nb_cur = jnp.broadcast_to(a[1:, N - 1:N, :], cur.shape)    # a[q][N-1]
    nb_prev = jnp.broadcast_to(a[:-1, N - 1:N, :], cur.shape)  # a[q-1][N-1]

    # TODO(synk): arctan has no guaranteed Mosaic lowering; the geometry /
    # heading-angle prologue is plain-JAX glue (cheap, XLA-fused) and the
    # kernel consumes the lane-dense bf16 (M, 16) feature matrix.
    def _angle(c, p):
        dx = c[..., 0] - p[..., 0]
        dy = c[..., 1] - p[..., 1]
        safe = jnp.where(dx == 0, 1.0, dx)
        # reference angle_l: x1 == 0  ->  +pi/2 regardless of dy sign
        return jnp.where(dx == 0, jnp.pi / 2, jnp.arctan(dy / safe))

    px, py = cur[..., 0], cur[..., 1]
    rx, ry = nb_cur[..., 0], nb_cur[..., 1]
    dis = jnp.sqrt((px - rx) ** 2 + (py - ry) ** 2)
    v1 = jnp.sqrt((px - prev[..., 0]) ** 2 + (py - prev[..., 1]) ** 2) / 0.5
    v2 = jnp.sqrt((rx - nb_prev[..., 0]) ** 2 + (ry - nb_prev[..., 1]) ** 2) / 0.5
    ang1 = _angle(cur, prev)
    ang2 = _angle(nb_cur, nb_prev)
    m = (dis <= 12.0).astype(jnp.float32)      # 2-input branch mask
    one = jnp.ones_like(px)
    z = jnp.zeros_like(px)

    F = jnp.stack([px, py, v1, ang1,
                   px * m, py * m, v1 * m, ang1 * m,
                   rx * m, ry * m, v2 * m, ang2 * m,
                   m, one, z, z], axis=-1)     # (T-1, N, 16)
    F = F.astype(jnp.bfloat16)                 # MXU operand dtype; halves DMA

    M = (T - 1) * N
    F = F.reshape(M, 16)

    # Shrink TM for small problems so the grid has >= 2 steps (keeps both v7x
    # TensorCores busy); keep it a multiple of 8 (sublane).
    tm_eff = min(tm, max(8, _round_up(pl.cdiv(M, 2), 8)))
    M_pad = _round_up(M, tm_eff)
    F = jnp.pad(F, ((0, M_pad - M), (0, 0)))

    grid = (M_pad // tm_eff,)
    row_spec = pl.BlockSpec((tm_eff, 16), lambda i: (i, 0))
    out_spec = pl.BlockSpec((tm_eff, 128), lambda i: (i, 0))

    def _wspec(shape):
        return pl.BlockSpec(shape, lambda i: (0, 0))   # VMEM-resident weights

    in_specs = [row_spec] + [_wspec(tuple(params[n].shape)) for n in _PARAM_ORDER]

    flops = 2 * M_pad * (16 * 512 + 512 * 256 + 256 * 8
                         + 8 * 256 + 256 * 128 + 128 * 128)
    bytes_accessed = M_pad * (16 + 128) * 2 + sum(
        int(np.prod(params[n].shape)) * params[n].dtype.itemsize
        for n in _PARAM_ORDER)

    slab = pl.pallas_call(
        _node_o_kernel,
        out_shape=jax.ShapeDtypeStruct((M_pad, 128), jnp.bfloat16),
        grid=grid,
        in_specs=in_specs,
        out_specs=out_spec,
        compiler_params=pltpu.CompilerParams(
            dimension_semantics=("parallel",),
            vmem_limit_bytes=48 * 1024 * 1024),
        cost_estimate=pl.CostEstimate(flops=flops, transcendentals=0,
                                      bytes_accessed=bytes_accessed),
    )(F, *[params[n] for n in _PARAM_ORDER])

    out64 = slab[:M, :64].astype(jnp.float32).reshape(T - 1, N, 64)
    out1 = slab[:M, 64].astype(jnp.float32).reshape(T - 1, N)

    # node_out = [node[0]] + node  (first time row duplicated), same for 64-d
    node_out2 = jnp.concatenate([out1[:1], out1], axis=0)            # (T, N)
    node_out2_64 = jnp.concatenate([out64[:1], out64], axis=0)       # (T, N, 64)
    return node_out2, node_out2_64


if __name__ == "__main__":
    key = jax.random.PRNGKey(0)
    k_a, k_p = jax.random.split(key)
    # (T, N, 2): 8 time steps, 4 agents, xy coordinates in [0, 20)
    a = jax.random.uniform(k_a, (8, 4, 2), jnp.float32, 0.0, 20.0)
    params = pack_params(init_params(k_p))

    fwd = jax.jit(node_o_forward)
    node_out2, node_out2_64 = fwd(a, params)
    jax.block_until_ready((node_out2, node_out2_64))

    assert node_out2.shape == (8, 4)
    assert node_out2_64.shape == (8, 4, 64)
    assert node_out2.dtype == jnp.float32 and node_out2_64.dtype == jnp.float32
    assert bool(jnp.all(jnp.isfinite(node_out2)))
    assert bool(jnp.all(jnp.isfinite(node_out2_64)))
    print("KERNEL_OK")
</pallas_src>

<mosaic_0001>
module attributes {stable_mosaic.version = 11 : i64} {
  func.func @_node_o_kernel(%arg0: i32, %arg1: memref<16x16xbf16, #tpu.memory_space<vmem>>, %arg2: memref<16x512xbf16, #tpu.memory_space<vmem>>, %arg3: memref<512x256xbf16, #tpu.memory_space<vmem>>, %arg4: memref<1x256xbf16, #tpu.memory_space<vmem>>, %arg5: memref<256x8xbf16, #tpu.memory_space<vmem>>, %arg6: memref<1x8xbf16, #tpu.memory_space<vmem>>, %arg7: memref<8x256xbf16, #tpu.memory_space<vmem>>, %arg8: memref<256x128xbf16, #tpu.memory_space<vmem>>, %arg9: memref<1x128xbf16, #tpu.memory_space<vmem>>, %arg10: memref<128x128xbf16, #tpu.memory_space<vmem>>, %arg11: memref<1x128xbf16, #tpu.memory_space<vmem>>, %arg12: memref<16x128xbf16, #tpu.memory_space<vmem>>) attributes {dimension_semantics = [#tpu.dimension_semantics<parallel>], iteration_bounds = array<i64: 2>, scalar_prefetch = 0 : i64, scratch_operands = 0 : i64, tpu.core_type = #tpu.core_type<tc>, window_params = [{transform_indices = @transform_0, window_bounds = array<i64: 16, 16>}, {pipeline_mode = #tpu.pipeline_mode<synchronous>, transform_indices = @transform_1, window_bounds = array<i64: 16, 512>}, {pipeline_mode = #tpu.pipeline_mode<synchronous>, transform_indices = @transform_2, window_bounds = array<i64: 512, 256>}, {pipeline_mode = #tpu.pipeline_mode<synchronous>, transform_indices = @transform_3, window_bounds = array<i64: 1, 256>}, {pipeline_mode = #tpu.pipeline_mode<synchronous>, transform_indices = @transform_4, window_bounds = array<i64: 256, 8>}, {pipeline_mode = #tpu.pipeline_mode<synchronous>, transform_indices = @transform_5, window_bounds = array<i64: 1, 8>}, {pipeline_mode = #tpu.pipeline_mode<synchronous>, transform_indices = @transform_6, window_bounds = array<i64: 8, 256>}, {pipeline_mode = #tpu.pipeline_mode<synchronous>, transform_indices = @transform_7, window_bounds = array<i64: 256, 128>}, {pipeline_mode = #tpu.pipeline_mode<synchronous>, transform_indices = @transform_8, window_bounds = array<i64: 1, 128>}, {pipeline_mode = #tpu.pipeline_mode<synchronous>, transform_indices = @transform_9, window_bounds = array<i64: 128, 128>}, {pipeline_mode = #tpu.pipeline_mode<synchronous>, transform_indices = @transform_10, window_bounds = array<i64: 1, 128>}, {transform_indices = @transform_11, window_bounds = array<i64: 16, 128>}]} {
    %c0 = arith.constant 0 : index
    %c0_0 = arith.constant 0 : index
    %0 = vector.load %arg1[%c0, %c0_0] : memref<16x16xbf16, #tpu.memory_space<vmem>>, vector<16x16xbf16>
    %c0_1 = arith.constant 0 : index
    %c0_2 = arith.constant 0 : index
    %1 = vector.load %arg2[%c0_1, %c0_2] : memref<16x512xbf16, #tpu.memory_space<vmem>>, vector<16x512xbf16>
    %cst = arith.constant dense<0.000000e+00> : vector<16x512xf32>
    %2 = tpu.matmul %0, %1, %cst {dimension_numbers = #tpu.dot_dimension_numbers<[1], [0], [0], [1], [0, 0, 1, 1], [], []>} : vector<16x16xbf16>, vector<16x512xbf16>, vector<16x512xf32> -> vector<16x512xf32>
    %3 = arith.truncf %2 : vector<16x512xf32> to vector<16x512xbf16>
    %cst_3 = arith.constant 2.500000e-01 : bf16
    %4 = vector.broadcast %cst_3 : bf16 to vector<16x512xbf16>
    %5 = arith.mulf %4, %3 : vector<16x512xbf16>
    %6 = arith.maximumf %3, %5 : vector<16x512xbf16>
    %c0_4 = arith.constant 0 : index
    %c0_5 = arith.constant 0 : index
    %7 = vector.load %arg3[%c0_4, %c0_5] : memref<512x256xbf16, #tpu.memory_space<vmem>>, vector<512x256xbf16>
    %cst_6 = arith.constant dense<0.000000e+00> : vector<16x256xf32>
    %8 = tpu.matmul %6, %7, %cst_6 {dimension_numbers = #tpu.dot_dimension_numbers<[1], [0], [0], [1], [0, 0, 1, 1], [], []>} : vector<16x512xbf16>, vector<512x256xbf16>, vector<16x256xf32> -> vector<16x256xf32>
    %9 = arith.truncf %8 : vector<16x256xf32> to vector<16x256xbf16>
    %c0_7 = arith.constant 0 : index
    %c0_8 = arith.constant 0 : index
    %10 = vector.load %arg4[%c0_7, %c0_8] : memref<1x256xbf16, #tpu.memory_space<vmem>>, vector<1x256xbf16>
    %11 = vector.broadcast %10 : vector<1x256xbf16> to vector<16x256xbf16>
    %12 = arith.addf %9, %11 : vector<16x256xbf16>
    %cst_9 = arith.constant 2.500000e-01 : bf16
    %13 = vector.broadcast %cst_9 : bf16 to vector<16x256xbf16>
    %14 = arith.mulf %13, %12 : vector<16x256xbf16>
    %15 = arith.maximumf %12, %14 : vector<16x256xbf16>
    %c0_10 = arith.constant 0 : index
    %c0_11 = arith.constant 0 : index
    %16 = vector.load %arg5[%c0_10, %c0_11] : memref<256x8xbf16, #tpu.memory_space<vmem>>, vector<256x8xbf16>
    %cst_12 = arith.constant dense<0.000000e+00> : vector<16x8xf32>
    %17 = tpu.matmul %15, %16, %cst_12 {dimension_numbers = #tpu.dot_dimension_numbers<[1], [0], [0], [1], [0, 0, 1, 1], [], []>} : vector<16x256xbf16>, vector<256x8xbf16>, vector<16x8xf32> -> vector<16x8xf32>
    %18 = arith.truncf %17 : vector<16x8xf32> to vector<16x8xbf16>
    %c0_13 = arith.constant 0 : index
    %c0_14 = arith.constant 0 : index
    %19 = vector.load %arg6[%c0_13, %c0_14] : memref<1x8xbf16, #tpu.memory_space<vmem>>, vector<1x8xbf16>
    %20 = vector.broadcast %19 : vector<1x8xbf16> to vector<16x8xbf16>
    %21 = arith.addf %18, %20 : vector<16x8xbf16>
    %cst_15 = arith.constant 2.500000e-01 : bf16
    %22 = vector.broadcast %cst_15 : bf16 to vector<16x8xbf16>
    %23 = arith.mulf %22, %21 : vector<16x8xbf16>
    %24 = arith.maximumf %21, %23 : vector<16x8xbf16>
    %c0_16 = arith.constant 0 : index
    %c0_17 = arith.constant 0 : index
    %25 = vector.load %arg7[%c0_16, %c0_17] : memref<8x256xbf16, #tpu.memory_space<vmem>>, vector<8x256xbf16>
    %cst_18 = arith.constant dense<0.000000e+00> : vector<16x256xf32>
    %26 = tpu.matmul %24, %25, %cst_18 {dimension_numbers = #tpu.dot_dimension_numbers<[1], [0], [0], [1], [0, 0, 1, 1], [], []>} : vector<16x8xbf16>, vector<8x256xbf16>, vector<16x256xf32> -> vector<16x256xf32>
    %27 = arith.truncf %26 : vector<16x256xf32> to vector<16x256xbf16>
    %cst_19 = arith.constant 2.500000e-01 : bf16
    %28 = vector.broadcast %cst_19 : bf16 to vector<16x256xbf16>
    %29 = arith.mulf %28, %27 : vector<16x256xbf16>
    %30 = arith.maximumf %27, %29 : vector<16x256xbf16>
    %c0_20 = arith.constant 0 : index
    %c0_21 = arith.constant 0 : index
    %31 = vector.load %arg8[%c0_20, %c0_21] : memref<256x128xbf16, #tpu.memory_space<vmem>>, vector<256x128xbf16>
    %cst_22 = arith.constant dense<0.000000e+00> : vector<16x128xf32>
    %32 = tpu.matmul %30, %31, %cst_22 {dimension_numbers = #tpu.dot_dimension_numbers<[1], [0], [0], [1], [0, 0, 1, 1], [], []>} : vector<16x256xbf16>, vector<256x128xbf16>, vector<16x128xf32> -> vector<16x128xf32>
    %33 = arith.truncf %32 : vector<16x128xf32> to vector<16x128xbf16>
    %c0_23 = arith.constant 0 : index
    %c0_24 = arith.constant 0 : index
    %34 = vector.load %arg9[%c0_23, %c0_24] : memref<1x128xbf16, #tpu.memory_space<vmem>>, vector<1x128xbf16>
    %35 = vector.broadcast %34 : vector<1x128xbf16> to vector<16x128xbf16>
    %36 = arith.addf %33, %35 : vector<16x128xbf16>
    %cst_25 = arith.constant 2.500000e-01 : bf16
    %37 = vector.broadcast %cst_25 : bf16 to vector<16x128xbf16>
    %38 = arith.mulf %37, %36 : vector<16x128xbf16>
    %39 = arith.maximumf %36, %38 : vector<16x128xbf16>
    %c0_26 = arith.constant 0 : index
    %c0_27 = arith.constant 0 : index
    %40 = vector.load %arg10[%c0_26, %c0_27] : memref<128x128xbf16, #tpu.memory_space<vmem>>, vector<128x128xbf16>
    %cst_28 = arith.constant dense<0.000000e+00> : vector<16x128xf32>
    %41 = tpu.matmul %39, %40, %cst_28 {dimension_numbers = #tpu.dot_dimension_numbers<[1], [0], [0], [1], [0, 0, 1, 1], [], []>} : vector<16x128xbf16>, vector<128x128xbf16>, vector<16x128xf32> -> vector<16x128xf32>
    %42 = arith.truncf %41 : vector<16x128xf32> to vector<16x128xbf16>
    %c0_29 = arith.constant 0 : index
    %c0_30 = arith.constant 0 : index
    %43 = vector.load %arg11[%c0_29, %c0_30] : memref<1x128xbf16, #tpu.memory_space<vmem>>, vector<1x128xbf16>
    %44 = vector.broadcast %43 : vector<1x128xbf16> to vector<16x128xbf16>
    %45 = arith.addf %42, %44 : vector<16x128xbf16>
    %cst_31 = arith.constant 2.500000e-01 : bf16
    %46 = vector.broadcast %cst_31 : bf16 to vector<16x128xbf16>
    %47 = arith.mulf %46, %45 : vector<16x128xbf16>
    %48 = arith.maximumf %45, %47 : vector<16x128xbf16>
    %c0_32 = arith.constant 0 : index
    %c0_33 = arith.constant 0 : index
    %49 = vector.load %arg12[%c0_32, %c0_33] : memref<16x128xbf16, #tpu.memory_space<vmem>>, vector<16x128xbf16>
    tpu.vector_store %arg12[%c0_32, %c0_33], %48 {strides = array<i32>} : memref<16x128xbf16, #tpu.memory_space<vmem>>, vector<16x128xbf16>,
    return
  }
  func.func @transform_0(%arg0: i32) -> (i32, i32) {
    %c0_i32 = arith.constant 0 : i32
    %c0_i32_0 = arith.constant 0 : i32
    return %arg0, %c0_i32 : i32, i32
  }
  func.func @transform_1(%arg0: i32) -> (i32, i32) {
    %c0_i32 = arith.constant 0 : i32
    %c0_i32_0 = arith.constant 0 : i32
    %c0_i32_1 = arith.constant 0 : i32
    return %c0_i32, %c0_i32_0 : i32, i32
  }
  func.func @transform_2(%arg0: i32) -> (i32, i32) {
    %c0_i32 = arith.constant 0 : i32
    %c0_i32_0 = arith.constant 0 : i32
    %c0_i32_1 = arith.constant 0 : i32
    return %c0_i32, %c0_i32_0 : i32, i32
  }
  func.func @transform_3(%arg0: i32) -> (i32, i32) {
    %c0_i32 = arith.constant 0 : i32
    %c0_i32_0 = arith.constant 0 : i32
    %c0_i32_1 = arith.constant 0 : i32
    return %c0_i32, %c0_i32_0 : i32, i32
  }
  func.func @transform_4(%arg0: i32) -> (i32, i32) {
    %c0_i32 = arith.constant 0 : i32
    %c0_i32_0 = arith.constant 0 : i32
    %c0_i32_1 = arith.constant 0 : i32
    return %c0_i32, %c0_i32_0 : i32, i32
  }
  func.func @transform_5(%arg0: i32) -> (i32, i32) {
    %c0_i32 = arith.constant 0 : i32
    %c0_i32_0 = arith.constant 0 : i32
    %c0_i32_1 = arith.constant 0 : i32
    return %c0_i32, %c0_i32_0 : i32, i32
  }
  func.func @transform_6(%arg0: i32) -> (i32, i32) {
    %c0_i32 = arith.constant 0 : i32
    %c0_i32_0 = arith.constant 0 : i32
    %c0_i32_1 = arith.constant 0 : i32
    return %c0_i32, %c0_i32_0 : i32, i32
  }
  func.func @transform_7(%arg0: i32) -> (i32, i32) {
    %c0_i32 = arith.constant 0 : i32
    %c0_i32_0 = arith.constant 0 : i32
    %c0_i32_1 = arith.constant 0 : i32
    return %c0_i32, %c0_i32_0 : i32, i32
  }
  func.func @transform_8(%arg0: i32) -> (i32, i32) {
    %c0_i32 = arith.constant 0 : i32
    %c0_i32_0 = arith.constant 0 : i32
    %c0_i32_1 = arith.constant 0 : i32
    return %c0_i32, %c0_i32_0 : i32, i32
  }
  func.func @transform_9(%arg0: i32) -> (i32, i32) {
    %c0_i32 = arith.constant 0 : i32
    %c0_i32_0 = arith.constant 0 : i32
    %c0_i32_1 = arith.constant 0 : i32
    return %c0_i32, %c0_i32_0 : i32, i32
  }
  func.func @transform_10(%arg0: i32) -> (i32, i32) {
    %c0_i32 = arith.constant 0 : i32
    %c0_i32_0 = arith.constant 0 : i32
    %c0_i32_1 = arith.constant 0 : i32
    return %c0_i32, %c0_i32_0 : i32, i32
  }
  func.func @transform_11(%arg0: i32) -> (i32, i32) {
    %c0_i32 = arith.constant 0 : i32
    %c0_i32_0 = arith.constant 0 : i32
    return %arg0, %c0_i32 : i32, i32
  }
}

</mosaic_0001>

<llo_original>
// kernel: node_o_forward.1
$region0: #{node_o_forward.1}
  #allocation0 [shape = 'u32[]', space=smem, size = 0x4, offset = 0x4, fixed_abs, tag = 'smem constant byte address 0x4 - core index']
  #allocation1 [shape = 'u32[72,128]{1,0:T(1,128)}', space=vmem, size = 0x9000, scoped, tag = 'internal scratch']
  %s0 = inlined_call_operand.vmem [shape: bf16[32,16], index: 0, kind: input, shape index: {}]
  %s1 = inlined_call_operand.vmem [shape: bf16[16,512], index: 1, kind: input, shape index: {}]
  %s2 = inlined_call_operand.vmem [shape: bf16[512,256], index: 2, kind: input, shape index: {}]
  %s3 = inlined_call_operand.vmem [shape: bf16[1,256], index: 3, kind: input, shape index: {}]
  %s4 = inlined_call_operand.vmem [shape: bf16[256,8], index: 4, kind: input, shape index: {}]
  %s5 = inlined_call_operand.vmem [shape: bf16[1,8], index: 5, kind: input, shape index: {}]
  %s6 = inlined_call_operand.vmem [shape: bf16[8,256], index: 6, kind: input, shape index: {}]
  %s7 = inlined_call_operand.vmem [shape: bf16[256,128], index: 7, kind: input, shape index: {}]
  %s8 = inlined_call_operand.vmem [shape: bf16[1,128], index: 8, kind: input, shape index: {}]
  %s9 = inlined_call_operand.vmem [shape: bf16[128,128], index: 9, kind: input, shape index: {}]
  %s10 = inlined_call_operand.vmem [shape: bf16[1,128], index: 10, kind: input, shape index: {}]
  %s11 = inlined_call_operand.vmem [shape: bf16[32,128], index: 11, kind: output, shape index: {}]
  %s12 = sld [smem:[#allocation0]]
  $region77: #{node_o_forward.1} parent=0
    _
  %s14 = ssub.s32 1, %s12
  %s15 = scalar_select 0, %s14, %s12
  loop: start=0, step=1, limit=4
  $region2: #{node_o_forward.1} parent=0 // loop_pre_header
    _
  $region3: #{node_o_forward.1} parent=0 // loop_header
    %s17 = sphi 0, %s21
    %p18 = scmp.ge.s32.totalorder %s17, 4
    %s27 = sphi 0, %s29
    %s30 = sphi 0, %s27
    %s31 = sphi 0, %s30
    %s47 = sphi 0, %s31
    %s51 = sphi 0, %s51
    %s53 = sphi 0, %s51
    %s54 = sphi 0, %s53
    %s68 = sphi 0, %s54
    %s72 = sphi 0, %s72
    %s74 = sphi 0, %s72
    %s75 = sphi 0, %s74
    %s89 = sphi 0, %s75
    %s93 = sphi 0, %s93
    %s95 = sphi 0, %s93
    %s96 = sphi 0, %s95
    %s110 = sphi 0, %s96
    %s114 = sphi 0, %s114
    %s116 = sphi 0, %s114
    %s117 = sphi 0, %s116
    %s131 = sphi 0, %s117
    %s135 = sphi 0, %s135
    %s137 = sphi 0, %s135
    %s138 = sphi 0, %s137
    %s152 = sphi 0, %s138
    %s156 = sphi 0, %s156
    %s158 = sphi 0, %s156
    %s159 = sphi 0, %s158
    %s173 = sphi 0, %s159
    %s177 = sphi 0, %s177
    %s179 = sphi 0, %s177
    %s180 = sphi 0, %s179
    %s194 = sphi 0, %s180
    %s198 = sphi 0, %s198
    %s200 = sphi 0, %s198
    %s201 = sphi 0, %s200
    %s215 = sphi 0, %s201
    %s219 = sphi 0, %s219
    %s221 = sphi 0, %s219
    %s222 = sphi 0, %s221
    %s236 = sphi 0, %s222
    %s240 = sphi 0, %s240
    %s242 = sphi 0, %s240
    %s243 = sphi 0, %s242
    %s257 = sphi 0, %s243
    %s263 = sphi 0, %s265
    %s266 = sphi 0, %s263
    %s267 = sphi 0, %s266
    %s283 = sphi 0, %s267
  $region4: #{node_o_forward.1} parent=0 // loop_header_branch
    %20 = sbr.rel (%p18) target = $region8
  $region5: #{node_o_forward.1} parent=0 // loop_body
    %s22 = ssub.s32 %s17, 1
    %s23 = ssub.s32 %s17, 2
    %s24 = sadd.s32 %s17, 1
    %s25 = ssub.s32 %s17, %s24
    %p26 = scmp.eq.s32.totalorder %s25, 0
    %s28 = sadd.s32 %s27, 1
    %s29 = scalar_select %p26, %s27, %s28
    %p32 = pneg %p26
    %p33 = scmp.eq.s32.totalorder %s17, 1
    %p34 = por %p32, %p33
    %p35 = scmp.ne.s32.totalorder %s27, %s30
    %p36 = scmp.eq.s32.totalorder %s17, 0
    %p37 = por %p35, %p36
    %p38 = scmp.ne.s32.totalorder %s27, %s30
    %p39 = scmp.eq.s32.totalorder %s22, 1
    %p40 = por %p38, %p39
    %p41 = scmp.ne.s32.totalorder %s30, %s31
    %p42 = scmp.eq.s32.totalorder %s22, 0
    %p43 = por %p41, %p42
    %p44 = scmp.ne.s32.totalorder %s30, %s31
    %p45 = scmp.eq.s32.totalorder %s23, 1
    %p46 = por %p44, %p45
    %p48 = scmp.ne.s32.totalorder %s31, %s47
    %p49 = scmp.eq.s32.totalorder %s23, 0
    %p50 = por %p48, %p49
    %s52 = sadd.s32 %s51, 1
    %p55 = scmp.eq.s32.totalorder %s17, 1
    %p56 = scmp.ne.s32.totalorder %s51, %s53
    %p57 = scmp.eq.s32.totalorder %s17, 0
    %p58 = por %p56, %p57
    %p59 = scmp.ne.s32.totalorder %s51, %s53
    %p60 = scmp.eq.s32.totalorder %s22, 1
    %p61 = por %p59, %p60
    %p62 = scmp.ne.s32.totalorder %s53, %s54
    %p63 = scmp.eq.s32.totalorder %s22, 0
    %p64 = por %p62, %p63
    %p65 = scmp.ne.s32.totalorder %s53, %s54
    %p66 = scmp.eq.s32.totalorder %s23, 1
    %p67 = por %p65, %p66
    %p69 = scmp.ne.s32.totalorder %s54, %s68
    %p70 = scmp.eq.s32.totalorder %s23, 0
    %p71 = por %p69, %p70
    %s73 = sadd.s32 %s72, 1
    %p76 = scmp.eq.s32.totalorder %s17, 1
    %p77 = scmp.ne.s32.totalorder %s72, %s74
    %p78 = scmp.eq.s32.totalorder %s17, 0
    %p79 = por %p77, %p78
    %p80 = scmp.ne.s32.totalorder %s72, %s74
    %p81 = scmp.eq.s32.totalorder %s22, 1
    %p82 = por %p80, %p81
    %p83 = scmp.ne.s32.totalorder %s74, %s75
    %p84 = scmp.eq.s32.totalorder %s22, 0
    %p85 = por %p83, %p84
    %p86 = scmp.ne.s32.totalorder %s74, %s75
    %p87 = scmp.eq.s32.totalorder %s23, 1
    %p88 = por %p86, %p87
    %p90 = scmp.ne.s32.totalorder %s75, %s89
    %p91 = scmp.eq.s32.totalorder %s23, 0
    %p92 = por %p90, %p91
    %s94 = sadd.s32 %s93, 1
    %p97 = scmp.eq.s32.totalorder %s17, 1
    %p98 = scmp.ne.s32.totalorder %s93, %s95
    %p99 = scmp.eq.s32.totalorder %s17, 0
    %p100 = por %p98, %p99
    %p101 = scmp.ne.s32.totalorder %s93, %s95
    %p102 = scmp.eq.s32.totalorder %s22, 1
    %p103 = por %p101, %p102
    %p104 = scmp.ne.s32.totalorder %s95, %s96
    %p105 = scmp.eq.s32.totalorder %s22, 0
    %p106 = por %p104, %p105
    %p107 = scmp.ne.s32.totalorder %s95, %s96
    %p108 = scmp.eq.s32.totalorder %s23, 1
    %p109 = por %p107, %p108
    %p111 = scmp.ne.s32.totalorder %s96, %s110
    %p112 = scmp.eq.s32.totalorder %s23, 0
    %p113 = por %p111, %p112
    %s115 = sadd.s32 %s114, 1
    %p118 = scmp.eq.s32.totalorder %s17, 1
    %p119 = scmp.ne.s32.totalorder %s114, %s116
    %p120 = scmp.eq.s32.totalorder %s17, 0
    %p121 = por %p119, %p120
    %p122 = scmp.ne.s32.totalorder %s114, %s116
    %p123 = scmp.eq.s32.totalorder %s22, 1
    %p124 = por %p122, %p123
    %p125 = scmp.ne.s32.totalorder %s116, %s117
    %p126 = scmp.eq.s32.totalorder %s22, 0
    %p127 = por %p125, %p126
    %p128 = scmp.ne.s32.totalorder %s116, %s117
    %p129 = scmp.eq.s32.totalorder %s23, 1
    %p130 = por %p128, %p129
    %p132 = scmp.ne.s32.totalorder %s117, %s131
    %p133 = scmp.eq.s32.totalorder %s23, 0
    %p134 = por %p132, %p133
    %s136 = sadd.s32 %s135, 1
    %p139 = scmp.eq.s32.totalorder %s17, 1
    %p140 = scmp.ne.s32.totalorder %s135, %s137
    %p141 = scmp.eq.s32.totalorder %s17, 0
    %p142 = por %p140, %p141
    %p143 = scmp.ne.s32.totalorder %s135, %s137
    %p144 = scmp.eq.s32.totalorder %s22, 1
    %p145 = por %p143, %p144
    %p146 = scmp.ne.s32.totalorder %s137, %s138
    %p147 = scmp.eq.s32.totalorder %s22, 0
    %p148 = por %p146, %p147
    %p149 = scmp.ne.s32.totalorder %s137, %s138
    %p150 = scmp.eq.s32.totalorder %s23, 1
    %p151 = por %p149, %p150
    %p153 = scmp.ne.s32.totalorder %s138, %s152
    %p154 = scmp.eq.s32.totalorder %s23, 0
    %p155 = por %p153, %p154
    %s157 = sadd.s32 %s156, 1
    %p160 = scmp.eq.s32.totalorder %s17, 1
    %p161 = scmp.ne.s32.totalorder %s156, %s158
    %p162 = scmp.eq.s32.totalorder %s17, 0
    %p163 = por %p161, %p162
    %p164 = scmp.ne.s32.totalorder %s156, %s158
    %p165 = scmp.eq.s32.totalorder %s22, 1
    %p166 = por %p164, %p165
    %p167 = scmp.ne.s32.totalorder %s158, %s159
    %p168 = scmp.eq.s32.totalorder %s22, 0
    %p169 = por %p167, %p168
    %p170 = scmp.ne.s32.totalorder %s158, %s159
    %p171 = scmp.eq.s32.totalorder %s23, 1
    %p172 = por %p170, %p171
    %p174 = scmp.ne.s32.totalorder %s159, %s173
    %p175 = scmp.eq.s32.totalorder %s23, 0
    %p176 = por %p174, %p175
    %s178 = sadd.s32 %s177, 1
    %p181 = scmp.eq.s32.totalorder %s17, 1
    %p182 = scmp.ne.s32.totalorder %s177, %s179
    %p183 = scmp.eq.s32.totalorder %s17, 0
    %p184 = por %p182, %p183
    %p185 = scmp.ne.s32.totalorder %s177, %s179
    %p186 = scmp.eq.s32.totalorder %s22, 1
    %p187 = por %p185, %p186
    %p188 = scmp.ne.s32.totalorder %s179, %s180
    %p189 = scmp.eq.s32.totalorder %s22, 0
    %p190 = por %p188, %p189
    %p191 = scmp.ne.s32.totalorder %s179, %s180
    %p192 = scmp.eq.s32.totalorder %s23, 1
    %p193 = por %p191, %p192
    %p195 = scmp.ne.s32.totalorder %s180, %s194
    %p196 = scmp.eq.s32.totalorder %s23, 0
    %p197 = por %p195, %p196
    %s199 = sadd.s32 %s198, 1
    %p202 = scmp.eq.s32.totalorder %s17, 1
    %p203 = scmp.ne.s32.totalorder %s198, %s200
    %p204 = scmp.eq.s32.totalorder %s17, 0
    %p205 = por %p203, %p204
    %p206 = scmp.ne.s32.totalorder %s198, %s200
    %p207 = scmp.eq.s32.totalorder %s22, 1
    %p208 = por %p206, %p207
    %p209 = scmp.ne.s32.totalorder %s200, %s201
    %p210 = scmp.eq.s32.totalorder %s22, 0
    %p211 = por %p209, %p210
    %p212 = scmp.ne.s32.totalorder %s200, %s201
    %p213 = scmp.eq.s32.totalorder %s23, 1
    %p214 = por %p212, %p213
    %p216 = scmp.ne.s32.totalorder %s201, %s215
    %p217 = scmp.eq.s32.totalorder %s23, 0
    %p218 = por %p216, %p217
    %s220 = sadd.s32 %s219, 1
    %p223 = scmp.eq.s32.totalorder %s17, 1
    %p224 = scmp.ne.s32.totalorder %s219, %s221
    %p225 = scmp.eq.s32.totalorder %s17, 0
    %p226 = por %p224, %p225
    %p227 = scmp.ne.s32.totalorder %s219, %s221
    %p228 = scmp.eq.s32.totalorder %s22, 1
    %p229 = por %p227, %p228
    %p230 = scmp.ne.s32.totalorder %s221, %s222
    %p231 = scmp.eq.s32.totalorder %s22, 0
    %p232 = por %p230, %p231
    %p233 = scmp.ne.s32.totalorder %s221, %s222
    %p234 = scmp.eq.s32.totalorder %s23, 1
    %p235 = por %p233, %p234
    %p237 = scmp.ne.s32.totalorder %s222, %s236
    %p238 = scmp.eq.s32.totalorder %s23, 0
    %p239 = por %p237, %p238
    %s241 = sadd.s32 %s240, 1
    %p244 = scmp.eq.s32.totalorder %s17, 1
    %p245 = scmp.ne.s32.totalorder %s240, %s242
    %p246 = scmp.eq.s32.totalorder %s17, 0
    %p247 = por %p245, %p246
    %p248 = scmp.ne.s32.totalorder %s240, %s242
    %p249 = scmp.eq.s32.totalorder %s22, 1
    %p250 = por %p248, %p249
    %p251 = scmp.ne.s32.totalorder %s242, %s243
    %p252 = scmp.eq.s32.totalorder %s22, 0
    %p253 = por %p251, %p252
    %p254 = scmp.ne.s32.totalorder %s242, %s243
    %p255 = scmp.eq.s32.totalorder %s23, 1
    %p256 = por %p254, %p255
    %p258 = scmp.ne.s32.totalorder %s243, %s257
    %p259 = scmp.eq.s32.totalorder %s23, 0
    %p260 = por %p258, %p259
    %s261 = ssub.s32 %s17, %s24
    %p262 = scmp.eq.s32.totalorder %s261, 0
    %s264 = sadd.s32 %s263, 1
    %s265 = scalar_select %p262, %s263, %s264
    %p268 = pneg %p262
    %p269 = scmp.eq.s32.totalorder %s17, 1
    %p270 = por %p268, %p269
    %p271 = scmp.ne.s32.totalorder %s263, %s266
    %p272 = scmp.eq.s32.totalorder %s17, 0
    %p273 = por %p271, %p272
    %p274 = scmp.ne.s32.totalorder %s263, %s266
    %p275 = scmp.eq.s32.totalorder %s22, 1
    %p276 = por %p274, %p275
    %p277 = scmp.ne.s32.totalorder %s266, %s267
    %p278 = scmp.eq.s32.totalorder %s22, 0
    %p279 = por %p277, %p278
    %p280 = scmp.ne.s32.totalorder %s266, %s267
    %p281 = scmp.eq.s32.totalorder %s23, 1
    %p282 = por %p280, %p281
    %p284 = scmp.ne.s32.totalorder %s267, %s283
    %p285 = scmp.eq.s32.totalorder %s23, 0
    %p286 = por %p284, %p285
    %p287 = scmp.le.s32.totalorder 1, %s17
    %p288 = scmp.lt.s32.totalorder %s17, 3
    %p289 = pnand %p287, %p288
    %p290 = pneg %p289
    // Predicated region
    $region9: #{node_o_forward.1} parent=5 // pred_check
      _
    $region10: #{node_o_forward.1} parent=5 // pred_check_branch
      %292 = sbr.rel (%p289) target = $region12
    $region11: #{node_o_forward.1} parent=5 // pred_region
      %s293 = ssub.s32 %s17, 1
      // Predicated region
      $region13: #{node_o_forward.1} parent=11 // pred_check
        %p294 = pneg %p64
      $region14: #{node_o_forward.1} parent=11 // pred_check_branch
        %296 = sbr.rel (%p294) target = $region16
      $region15: #{node_o_forward.1} parent=11 // pred_region
        _
      $region16: #{node_o_forward.1} parent=11 // pred_fallthru
        _
      // Predicated region
      $region17: #{node_o_forward.1} parent=11 // pred_check
        %p297 = pneg %p85
      $region18: #{node_o_forward.1} parent=11 // pred_check_branch
        %299 = sbr.rel (%p297) target = $region20
      $region19: #{node_o_forward.1} parent=11 // pred_region
        _
      $region20: #{node_o_forward.1} parent=11 // pred_fallthru
        _
      // Predicated region
      $region21: #{node_o_forward.1} parent=11 // pred_check
        %p300 = pneg %p106
      $region22: #{node_o_forward.1} parent=11 // pred_check_branch
        %302 = sbr.rel (%p300) target = $region24
      $region23: #{node_o_forward.1} parent=11 // pred_region
        _
      $region24: #{node_o_forward.1} parent=11 // pred_fallthru
        _
      // Predicated region
      $region25: #{node_o_forward.1} parent=11 // pred_check
        %p303 = pneg %p127
      $region26: #{node_o_forward.1} parent=11 // pred_check_branch
        %305 = sbr.rel (%p303) target = $region28
      $region27: #{node_o_forward.1} parent=11 // pred_region
        _
      $region28: #{node_o_forward.1} parent=11 // pred_fallthru
        _
      // Predicated region
      $region29: #{node_o_forward.1} parent=11 // pred_check
        %p306 = pneg %p148
      $region30: #{node_o_forward.1} parent=11 // pred_check_branch
        %308 = sbr.rel (%p306) target = $region32
      $region31: #{node_o_forward.1} parent=11 // pred_region
        _
      $region32: #{node_o_forward.1} parent=11 // pred_fallthru
        _
      // Predicated region
      $region33: #{node_o_forward.1} parent=11 // pred_check
        %p309 = pneg %p169
      $region34: #{node_o_forward.1} parent=11 // pred_check_branch
        %311 = sbr.rel (%p309) target = $region36
      $region35: #{node_o_forward.1} parent=11 // pred_region
        _
      $region36: #{node_o_forward.1} parent=11 // pred_fallthru
        _
      // Predicated region
      $region37: #{node_o_forward.1} parent=11 // pred_check
        %p312 = pneg %p190
      $region38: #{node_o_forward.1} parent=11 // pred_check_branch
        %314 = sbr.rel (%p312) target = $region40
      $region39: #{node_o_forward.1} parent=11 // pred_region
        _
      $region40: #{node_o_forward.1} parent=11 // pred_fallthru
        _
      // Predicated region
      $region41: #{node_o_forward.1} parent=11 // pred_check
        %p315 = pneg %p211
      $region42: #{node_o_forward.1} parent=11 // pred_check_branch
        %317 = sbr.rel (%p315) target = $region44
      $region43: #{node_o_forward.1} parent=11 // pred_region
        _
      $region44: #{node_o_forward.1} parent=11 // pred_fallthru
        _
      // Predicated region
      $region45: #{node_o_forward.1} parent=11 // pred_check
        %p318 = pneg %p232
      $region46: #{node_o_forward.1} parent=11 // pred_check_branch
        %320 = sbr.rel (%p318) target = $region48
      $region47: #{node_o_forward.1} parent=11 // pred_region
        _
      $region48: #{node_o_forward.1} parent=11 // pred_fallthru
        _
      // Predicated region
      $region49: #{node_o_forward.1} parent=11 // pred_check
        %p321 = pneg %p253
      $region50: #{node_o_forward.1} parent=11 // pred_check_branch
        %323 = sbr.rel (%p321) target = $region52
      $region51: #{node_o_forward.1} parent=11 // pred_region
        _
      $region52: #{node_o_forward.1} parent=11 // pred_fallthru
        _
    $region12: #{node_o_forward.1} parent=5 // pred_fallthru
      _
    %p324 = scmp.lt.s32.totalorder %s17, 2
    // Predicated region
    $region53: #{node_o_forward.1} parent=5 // pred_check
      %p325 = pneg %p324
    $region54: #{node_o_forward.1} parent=5 // pred_check_branch
      %327 = sbr.rel (%p325) target = $region56
    $region55: #{node_o_forward.1} parent=5 // pred_region
      // Predicated region
      $region57: #{node_o_forward.1} parent=55 // pred_check
        %p328 = pneg %p37
      $region58: #{node_o_forward.1} parent=55 // pred_check_branch
        %330 = sbr.rel (%p328) target = $region60
      $region59: #{node_o_forward.1} parent=55 // pred_region
        %s331 = smul.u32 2, %s17
        %p332 = scmp.lt.s32.totalorder %s331, 3
        %s333 = scalar_select %p332, %s331, 3
        %s334 = smul.addr %s333, 4
        %s335 = scalar_lea.vmem %s0, %s334
        %s336 = smul.u32 2, %s17
      $region60: #{node_o_forward.1} parent=55 // pred_fallthru
        _
    $region56: #{node_o_forward.1} parent=5 // pred_fallthru
      _
    %p337 = scmp.le.s32.totalorder 1, %s17
    %p338 = scmp.lt.s32.totalorder %s17, 3
    %p339 = pnand %p337, %p338
    %p340 = pneg %p339
    // Predicated region
    $region61: #{node_o_forward.1} parent=5 // pred_check
      _
    $region62: #{node_o_forward.1} parent=5 // pred_check_branch
      %342 = sbr.rel (%p339) target = $region64
    $region63: #{node_o_forward.1} parent=5 // pred_region
      %s343 = ssub.s32 %s17, 1
      %s344 = smul.u32 2, %s22
      %p345 = scmp.lt.s32.totalorder %s344, 3
      %s346 = scalar_select %p345, %s344, 3
      %s347 = smul.addr %s346, 4
      %s348 = scalar_lea.vmem %s0, %s347
      %p349 = pneg %p43
      %p350 = pneg %p40
      %p351 = pneg %p64
      %p352 = pneg %p61
      %p353 = pneg %p85
      %p354 = pneg %p82
      %p355 = pneg %p106
      %p356 = pneg %p103
      %p357 = pneg %p127
      %p358 = pneg %p124
      %p359 = pneg %p148
      %p360 = pneg %p145
      %p361 = pneg %p169
      %p362 = pneg %p166
      %p363 = pneg %p190
      %p364 = pneg %p187
      %p365 = pneg %p211
      %p366 = pneg %p208
      %p367 = pneg %p232
      %p368 = pneg %p229
      %p369 = pneg %p253
      %p370 = pneg %p250
      %p371 = pneg %p279
      %p372 = pneg %p276
      %s373 = smul.u32 2, %s22
      %p374 = scmp.lt.s32.totalorder %s373, 3
      %s375 = scalar_select %p374, %s373, 3
      %s376 = smul.addr %s375, 4
      %s377 = scalar_lea.vmem %s11, %s376
      %s378 = smul.u32 2, %s22
      %p379 = scmp.lt.s32.totalorder %s378, 3
      %s380 = scalar_select %p379, %s378, 3
      %s381 = smul.addr %s380, 4
      %s382 = scalar_lea.vmem %s0, %s381
      %s383 = smul.u32 2, %s22
      %s384 = smul.u32 2, %s22
      %p385 = scmp.lt.s32.totalorder %s384, 3
      %s386 = scalar_select %p385, %s384, 3
      %s387 = smul.addr %s386, 4
      %s388 = scalar_lea.vmem %s11, %s387
      %s389 = smul.u32 2, %s22
      %v391 = vld [vmem:[%s382] sm:$0xf]
      %v392 = vld [vmem:[%s382 + $0x4] sm:$0xf]
      %v393 = vld [vmem:[%s1] sm:$0xff]
      %v394 = vld [vmem:[%s1 + $0x8] sm:$0xff]
      %v395 = vld [vmem:[%s1 + $0x10] sm:$0xff]
      %v396 = vld [vmem:[%s1 + $0x18] sm:$0xff]
      %v399 = vunpack.c.l.b16 %v391
      %v400 = vunpack.c.l.b16 %v392
      %v401 = vpack.c.b16 %v400, %v399
      %v406 = vunpack.c.l.b16 %v393
      %v407 = vunpack.c.h.b16 %v393
      %v408 = vunpack.c.l.b16 %v394
      %v409 = vunpack.c.h.b16 %v394
      %v410 = vunpack.c.l.b16 %v395
      %v411 = vunpack.c.h.b16 %v395
      %v412 = vunpack.c.l.b16 %v396
      %v413 = vunpack.c.h.b16 %v396
      %v414 = vpack.c.b16 %v410, %v406
      %v415 = vpack.c.b16 %v411, %v407
      %v416 = vpack.c.b16 %v412, %v408
      %v417 = vpack.c.b16 %v413, %v409
      %vm422 = vcmask 130048
      %v424 = vsel %vm422, %v401, 0
      %426 = vmatpush.bf16.msra.mxu0 0
      %427 = vmatpush.bf16.msra.mxu0 0
      %428 = vmatpush.bf16.msra.mxu0 0
      %429 = vmatpush.bf16.msra.mxu0 0
      %430 = vmatpush.bf16.msra.mxu0 0
      %431 = vmatpush.bf16.msra.mxu0 0
      %432 = vmatpush.bf16.msra.mxu0 0
      %433 = vmatpush.bf16.msra.mxu0 %v414
      %434 = vmatmul.bf16.gmra.mxu0 %v424
      %v435 = vpop.f32.mrf.mxu0
      %v436 = vadd.f32 0.0, %v435
      %v437 = vpop.f32.mrf.mxu0
      %v438 = vadd.f32 0.0, %v437
      %439 = vdwg.mxu0
      %440 = vmatpush.bf16.msra.mxu0 0
      %441 = vmatpush.bf16.msra.mxu0 0
      %442 = vmatpush.bf16.msra.mxu0 0
      %443 = vmatpush.bf16.msra.mxu0 0
      %444 = vmatpush.bf16.msra.mxu0 0
      %445 = vmatpush.bf16.msra.mxu0 0
      %446 = vmatpush.bf16.msra.mxu0 0
      %447 = vmatpush.bf16.msra.mxu0 %v415
      %448 = vmatmul.bf16.gmra.mxu0 %v424
      %v449 = vpop.f32.mrf.mxu0
      %v450 = vadd.f32 0.0, %v449
      %v451 = vpop.f32.mrf.mxu0
      %v452 = vadd.f32 0.0, %v451
      %453 = vdwg.mxu0
      %454 = vmatpush.bf16.msra.mxu0 0
      %455 = vmatpush.bf16.msra.mxu0 0
      %456 = vmatpush.bf16.msra.mxu0 0
      %457 = vmatpush.bf16.msra.mxu0 0
      %458 = vmatpush.bf16.msra.mxu0 0
      %459 = vmatpush.bf16.msra.mxu0 0
      %460 = vmatpush.bf16.msra.mxu0 0
      %461 = vmatpush.bf16.msra.mxu0 %v416
      %462 = vmatmul.bf16.gmra.mxu0 %v424
      %v463 = vpop.f32.mrf.mxu0
      %v464 = vadd.f32 0.0, %v463
      %v465 = vpop.f32.mrf.mxu0
      %v466 = vadd.f32 0.0, %v465
      %467 = vdwg.mxu0
      %468 = vmatpush.bf16.msra.mxu0 0
      %469 = vmatpush.bf16.msra.mxu0 0
      %470 = vmatpush.bf16.msra.mxu0 0
      %471 = vmatpush.bf16.msra.mxu0 0
      %472 = vmatpush.bf16.msra.mxu0 0
      %473 = vmatpush.bf16.msra.mxu0 0
      %474 = vmatpush.bf16.msra.mxu0 0
      %475 = vmatpush.bf16.msra.mxu0 %v417
      %476 = vmatmul.bf16.gmra.mxu0 %v424
      %v477 = vpop.f32.mrf.mxu0
      %v478 = vadd.f32 0.0, %v477
      %v479 = vpop.f32.mrf.mxu0
      %v480 = vadd.f32 0.0, %v479
      %481 = vdwg.mxu0
      %v482 = vpack.c.bf16 %v450, %v436
      %v483 = vpack.c.bf16 %v478, %v464
      %v484 = vpack.c.bf16 %v452, %v438
      %v485 = vpack.c.bf16 %v480, %v466
      %v486 = vunpack.c.l.bf16 %v482
      %v487 = vunpack.c.h.bf16 %v482
      %v488 = vunpack.c.l.bf16 %v483
      %v489 = vunpack.c.h.bf16 %v483
      %v490 = vunpack.c.l.bf16 %v484
      %v491 = vunpack.c.h.bf16 %v484
      %v492 = vunpack.c.l.bf16 %v485
      %v493 = vunpack.c.h.bf16 %v485
      %v494 = vmul.f32 %v486, 0.25
      %v495 = vmul.f32 %v487, 0.25
      %v496 = vmul.f32 %v488, 0.25
      %v497 = vmul.f32 %v489, 0.25
      %v498 = vmul.f32 %v490, 0.25
      %v499 = vmul.f32 %v491, 0.25
      %v500 = vmul.f32 %v492, 0.25
      %v501 = vmul.f32 %v493, 0.25
      %v502 = vpack.c.bf16 %v495, %v494
      %v503 = vpack.c.bf16 %v497, %v496
      %v504 = vpack.c.bf16 %v499, %v498
      %v505 = vpack.c.bf16 %v501, %v500
      %v506 = vunpack.c.l.bf16 %v502
      %v507 = vunpack.c.h.bf16 %v502
      %v508 = vunpack.c.l.bf16 %v503
      %v509 = vunpack.c.h.bf16 %v503
      %v510 = vunpack.c.l.bf16 %v504
      %v511 = vunpack.c.h.bf16 %v504
      %v512 = vunpack.c.l.bf16 %v505
      %v513 = vunpack.c.h.bf16 %v505
      %v514 = vmax.f32 %v486, %v506
      %v515 = vmax.f32 %v487, %v507
      %v516 = vmax.f32 %v488, %v508
      %v517 = vmax.f32 %v489, %v509
      %v518 = vmax.f32 %v490, %v510
      %v519 = vmax.f32 %v491, %v511
      %v520 = vmax.f32 %v492, %v512
      %v521 = vmax.f32 %v493, %v513
      %v522 = vpack.c.bf16 %v518, %v514
      %v523 = vpack.c.bf16 %v519, %v515
      %v524 = vpack.c.bf16 %v520, %v516
      %v525 = vpack.c.bf16 %v521, %v517
      %v526 = vld [vmem:[%s2] sm:$0xff]
      %v527 = vld [vmem:[%s2 + $0x8] sm:$0xff]
      %v528 = vld [vmem:[%s2 + $0x10] sm:$0xff]
      %v529 = vld [vmem:[%s2 + $0x18] sm:$0xff]
      %v530 = vld [vmem:[%s2 + $0x20] sm:$0xff]
      %v531 = vld [vmem:[%s2 + $0x28] sm:$0xff]
      %v532 = vld [vmem:[%s2 + $0x30] sm:$0xff]
      %v533 = vld [vmem:[%s2 + $0x38] sm:$0xff]
      %v534 = vld [vmem:[%s2 + $0x40] sm:$0xff]
      %v535 = vld [vmem:[%s2 + $0x48] sm:$0xff]
      %v536 = vld [vmem:[%s2 + $0x50] sm:$0xff]
      %v537 = vld [vmem:[%s2 + $0x58] sm:$0xff]
      %v538 = vld [vmem:[%s2 + $0x60] sm:$0xff]
      %v539 = vld [vmem:[%s2 + $0x68] sm:$0xff]
      %v540 = vld [vmem:[%s2 + $0x70] sm:$0xff]
      %v541 = vld [vmem:[%s2 + $0x78] sm:$0xff]
      %v542 = vld [vmem:[%s2 + $0x80] sm:$0xff]
      %v543 = vld [vmem:[%s2 + $0x88] sm:$0xff]
      %v544 = vld [vmem:[%s2 + $0x90] sm:$0xff]
      %v545 = vld [vmem:[%s2 + $0x98] sm:$0xff]
      %v546 = vld [vmem:[%s2 + $0xa0] sm:$0xff]
      %v547 = vld [vmem:[%s2 + $0xa8] sm:$0xff]
      %v548 = vld [vmem:[%s2 + $0xb0] sm:$0xff]
      %v549 = vld [vmem:[%s2 + $0xb8] sm:$0xff]
      %v550 = vld [vmem:[%s2 + $0xc0] sm:$0xff]
      %v551 = vld [vmem:[%s2 + $0xc8] sm:$0xff]
      %v552 = vld [vmem:[%s2 + $0xd0] sm:$0xff]
      %v553 = vld [vmem:[%s2 + $0xd8] sm:$0xff]
      %v554 = vld [vmem:[%s2 + $0xe0] sm:$0xff]
      %v555 = vld [vmem:[%s2 + $0xe8] sm:$0xff]
      %v556 = vld [vmem:[%s2 + $0xf0] sm:$0xff]
      %v557 = vld [vmem:[%s2 + $0xf8] sm:$0xff]
      %v558 = vld [vmem:[%s2 + $0x100] sm:$0xff]
      %v559 = vld [vmem:[%s2 + $0x108] sm:$0xff]
      %v560 = vld [vmem:[%s2 + $0x110] sm:$0xff]
      %v561 = vld [vmem:[%s2 + $0x118] sm:$0xff]
      %v562 = vld [vmem:[%s2 + $0x120] sm:$0xff]
      %v563 = vld [vmem:[%s2 + $0x128] sm:$0xff]
      %v564 = vld [vmem:[%s2 + $0x130] sm:$0xff]
      %v565 = vld [vmem:[%s2 + $0x138] sm:$0xff]
      %v566 = vld [vmem:[%s2 + $0x140] sm:$0xff]
      %v567 = vld [vmem:[%s2 + $0x148] sm:$0xff]
      %v568 = vld [vmem:[%s2 + $0x150] sm:$0xff]
      %v569 = vld [vmem:[%s2 + $0x158] sm:$0xff]
      %v570 = vld [vmem:[%s2 + $0x160] sm:$0xff]
      %v571 = vld [vmem:[%s2 + $0x168] sm:$0xff]
      %v572 = vld [vmem:[%s2 + $0x170] sm:$0xff]
      %v573 = vld [vmem:[%s2 + $0x178] sm:$0xff]
      %v574 = vld [vmem:[%s2 + $0x180] sm:$0xff]
      %v575 = vld [vmem:[%s2 + $0x188] sm:$0xff]
      %v576 = vld [vmem:[%s2 + $0x190] sm:$0xff]
      %v577 = vld [vmem:[%s2 + $0x198] sm:$0xff]
      %v578 = vld [vmem:[%s2 + $0x1a0] sm:$0xff]
      %v579 = vld [vmem:[%s2 + $0x1a8] sm:$0xff]
      %v580 = vld [vmem:[%s2 + $0x1b0] sm:$0xff]
      %v581 = vld [vmem:[%s2 + $0x1b8] sm:$0xff]
      %v582 = vld [vmem:[%s2 + $0x1c0] sm:$0xff]
      %v583 = vld [vmem:[%s2 + $0x1c8] sm:$0xff]
      %v584 = vld [vmem:[%s2 + $0x1d0] sm:$0xff]
      %v585 = vld [vmem:[%s2 + $0x1d8] sm:$0xff]
      %v586 = vld [vmem:[%s2 + $0x1e0] sm:$0xff]
      %v587 = vld [vmem:[%s2 + $0x1e8] sm:$0xff]
      %v588 = vld [vmem:[%s2 + $0x1f0] sm:$0xff]
      %v589 = vld [vmem:[%s2 + $0x1f8] sm:$0xff]
      %v654 = vunpack.c.l.b16 %v526
      %v655 = vunpack.c.h.b16 %v526
      %v656 = vunpack.c.l.b16 %v527
      %v657 = vunpack.c.h.b16 %v527
      %v658 = vunpack.c.l.b16 %v528
      %v659 = vunpack.c.h.b16 %v528
      %v660 = vunpack.c.l.b16 %v529
      %v661 = vunpack.c.h.b16 %v529
      %v662 = vunpack.c.l.b16 %v530
      %v663 = vunpack.c.h.b16 %v530
      %v664 = vunpack.c.l.b16 %v531
      %v665 = vunpack.c.h.b16 %v531
      %v666 = vunpack.c.l.b16 %v532
      %v667 = vunpack.c.h.b16 %v532
      %v668 = vunpack.c.l.b16 %v533
      %v669 = vunpack.c.h.b16 %v533
      %v670 = vunpack.c.l.b16 %v534
      %v671 = vunpack.c.h.b16 %v534
      %v672 = vunpack.c.l.b16 %v535
      %v673 = vunpack.c.h.b16 %v535
      %v674 = vunpack.c.l.b16 %v536
      %v675 = vunpack.c.h.b16 %v536
      %v676 = vunpack.c.l.b16 %v537
      %v677 = vunpack.c.h.b16 %v537
      %v678 = vunpack.c.l.b16 %v538
      %v679 = vunpack.c.h.b16 %v538
      %v680 = vunpack.c.l.b16 %v539
      %v681 = vunpack.c.h.b16 %v539
      %v682 = vunpack.c.l.b16 %v540
      %v683 = vunpack.c.h.b16 %v540
      %v684 = vunpack.c.l.b16 %v541
      %v685 = vunpack.c.h.b16 %v541
      %v686 = vunpack.c.l.b16 %v542
      %v687 = vunpack.c.h.b16 %v542
      %v688 = vunpack.c.l.b16 %v543
      %v689 = vunpack.c.h.b16 %v543
      %v690 = vunpack.c.l.b16 %v544
      %v691 = vunpack.c.h.b16 %v544
      %v692 = vunpack.c.l.b16 %v545
      %v693 = vunpack.c.h.b16 %v545
      %v694 = vunpack.c.l.b16 %v546
      %v695 = vunpack.c.h.b16 %v546
      %v696 = vunpack.c.l.b16 %v547
      %v697 = vunpack.c.h.b16 %v547
      %v698 = vunpack.c.l.b16 %v548
      %v699 = vunpack.c.h.b16 %v548
      %v700 = vunpack.c.l.b16 %v549
      %v701 = vunpack.c.h.b16 %v549
      %v702 = vunpack.c.l.b16 %v550
      %v703 = vunpack.c.h.b16 %v550
      %v704 = vunpack.c.l.b16 %v551
      %v705 = vunpack.c.h.b16 %v551
      %v706 = vunpack.c.l.b16 %v552
      %v707 = vunpack.c.h.b16 %v552
      %v708 = vunpack.c.l.b16 %v553
      %v709 = vunpack.c.h.b16 %v553
      %v710 = vunpack.c.l.b16 %v554
      %v711 = vunpack.c.h.b16 %v554
      %v712 = vunpack.c.l.b16 %v555
      %v713 = vunpack.c.h.b16 %v555
      %v714 = vunpack.c.l.b16 %v556
      %v715 = vunpack.c.h.b16 %v556
      %v716 = vunpack.c.l.b16 %v557
      %v717 = vunpack.c.h.b16 %v557
      %v718 = vunpack.c.l.b16 %v558
      %v719 = vunpack.c.h.b16 %v558
      %v720 = vunpack.c.l.b16 %v559
      %v721 = vunpack.c.h.b16 %v559
      %v722 = vunpack.c.l.b16 %v560
      %v723 = vunpack.c.h.b16 %v560
      %v724 = vunpack.c.l.b16 %v561
      %v725 = vunpack.c.h.b16 %v561
      %v726 = vunpack.c.l.b16 %v562
      %v727 = vunpack.c.h.b16 %v562
      %v728 = vunpack.c.l.b16 %v563
      %v729 = vunpack.c.h.b16 %v563
      %v730 = vunpack.c.l.b16 %v564
      %v731 = vunpack.c.h.b16 %v564
      %v732 = vunpack.c.l.b16 %v565
      %v733 = vunpack.c.h.b16 %v565
      %v734 = vunpack.c.l.b16 %v566
      %v735 = vunpack.c.h.b16 %v566
      %v736 = vunpack.c.l.b16 %v567
      %v737 = vunpack.c.h.b16 %v567
      %v738 = vunpack.c.l.b16 %v568
      %v739 = vunpack.c.h.b16 %v568
      %v740 = vunpack.c.l.b16 %v569
      %v741 = vunpack.c.h.b16 %v569
      %v742 = vunpack.c.l.b16 %v570
      %v743 = vunpack.c.h.b16 %v570
      %v744 = vunpack.c.l.b16 %v571
      %v745 = vunpack.c.h.b16 %v571
      %v746 = vunpack.c.l.b16 %v572
      %v747 = vunpack.c.h.b16 %v572
      %v748 = vunpack.c.l.b16 %v573
      %v749 = vunpack.c.h.b16 %v573
      %v750 = vunpack.c.l.b16 %v574
      %v751 = vunpack.c.h.b16 %v574
      %v752 = vunpack.c.l.b16 %v575
      %v753 = vunpack.c.h.b16 %v575
      %v754 = vunpack.c.l.b16 %v576
      %v755 = vunpack.c.h.b16 %v576
      %v756 = vunpack.c.l.b16 %v577
      %v757 = vunpack.c.h.b16 %v577
      %v758 = vunpack.c.l.b16 %v578
      %v759 = vunpack.c.h.b16 %v578
      %v760 = vunpack.c.l.b16 %v579
      %v761 = vunpack.c.h.b16 %v579
      %v762 = vunpack.c.l.b16 %v580
      %v763 = vunpack.c.h.b16 %v580
      %v764 = vunpack.c.l.b16 %v581
      %v765 = vunpack.c.h.b16 %v581
      %v766 = vunpack.c.l.b16 %v582
      %v767 = vunpack.c.h.b16 %v582
      %v768 = vunpack.c.l.b16 %v583
      %v769 = vunpack.c.h.b16 %v583
      %v770 = vunpack.c.l.b16 %v584
      %v771 = vunpack.c.h.b16 %v584
      %v772 = vunpack.c.l.b16 %v585
      %v773 = vunpack.c.h.b16 %v585
      %v774 = vunpack.c.l.b16 %v586
      %v775 = vunpack.c.h.b16 %v586
      %v776 = vunpack.c.l.b16 %v587
      %v777 = vunpack.c.h.b16 %v587
      %v778 = vunpack.c.l.b16 %v588
      %v779 = vunpack.c.h.b16 %v588
      %v780 = vunpack.c.l.b16 %v589
      %v781 = vunpack.c.h.b16 %v589
      %v782 = vpack.c.b16 %v656, %v654
      %v783 = vpack.c.b16 %v657, %v655
      %v784 = vpack.c.b16 %v660, %v658
      %v785 = vpack.c.b16 %v661, %v659
      %v786 = vpack.c.b16 %v664, %v662
      %v787 = vpack.c.b16 %v665, %v663
      %v788 = vpack.c.b16 %v668, %v666
      %v789 = vpack.c.b16 %v669, %v667
      %v790 = vpack.c.b16 %v672, %v670
      %v791 = vpack.c.b16 %v673, %v671
      %v792 = vpack.c.b16 %v676, %v674
      %v793 = vpack.c.b16 %v677, %v675
      %v794 = vpack.c.b16 %v680, %v678
      %v795 = vpack.c.b16 %v681, %v679
      %v796 = vpack.c.b16 %v684, %v682
      %v797 = vpack.c.b16 %v685, %v683
      %v798 = vpack.c.b16 %v688, %v686
      %v799 = vpack.c.b16 %v689, %v687
      %v800 = vpack.c.b16 %v692, %v690
      %v801 = vpack.c.b16 %v693, %v691
      %v802 = vpack.c.b16 %v696, %v694
      %v803 = vpack.c.b16 %v697, %v695
      %v804 = vpack.c.b16 %v700, %v698
      %v805 = vpack.c.b16 %v701, %v699
      %v806 = vpack.c.b16 %v704, %v702
      %v807 = vpack.c.b16 %v705, %v703
      %v808 = vpack.c.b16 %v708, %v706
      %v809 = vpack.c.b16 %v709, %v707
      %v810 = vpack.c.b16 %v712, %v710
      %v811 = vpack.c.b16 %v713, %v711
      %v812 = vpack.c.b16 %v716, %v714
      %v813 = vpack.c.b16 %v717, %v715
      %v814 = vpack.c.b16 %v720, %v718
      %v815 = vpack.c.b16 %v721, %v719
      %v816 = vpack.c.b16 %v724, %v722
      %v817 = vpack.c.b16 %v725, %v723
      %v818 = vpack.c.b16 %v728, %v726
      %v819 = vpack.c.b16 %v729, %v727
      %v820 = vpack.c.b16 %v732, %v730
      %v821 = vpack.c.b16 %v733, %v731
      %v822 = vpack.c.b16 %v736, %v734
      %v823 = vpack.c.b16 %v737, %v735
      %v824 = vpack.c.b16 %v740, %v738
      %v825 = vpack.c.b16 %v741, %v739
      %v826 = vpack.c.b16 %v744, %v742
      %v827 = vpack.c.b16 %v745, %v743
      %v828 = vpack.c.b16 %v748, %v746
      %v829 = vpack.c.b16 %v749, %v747
      %v830 = vpack.c.b16 %v752, %v750
      %v831 = vpack.c.b16 %v753, %v751
      %v832 = vpack.c.b16 %v756, %v754
      %v833 = vpack.c.b16 %v757, %v755
      %v834 = vpack.c.b16 %v760, %v758
      %v835 = vpack.c.b16 %v761, %v759
      %v836 = vpack.c.b16 %v764, %v762
      %v837 = vpack.c.b16 %v765, %v763
      %v838 = vpack.c.b16 %v768, %v766
      %v839 = vpack.c.b16 %v769, %v767
      %v840 = vpack.c.b16 %v772, %v770
      %v841 = vpack.c.b16 %v773, %v771
      %v842 = vpack.c.b16 %v776, %v774
      %v843 = vpack.c.b16 %v777, %v775
      %v844 = vpack.c.b16 %v780, %v778
      %v845 = vpack.c.b16 %v781, %v779
      %910 = vmatpush.bf16.msra.mxu0 %v796
      %911 = vmatpush.bf16.msra.mxu0 %v794
      %912 = vmatpush.bf16.msra.mxu0 %v792
      %913 = vmatpush.bf16.msra.mxu0 %v790
      %914 = vmatpush.bf16.msra.mxu0 %v788
      %915 = vmatpush.bf16.msra.mxu0 %v786
      %916 = vmatpush.bf16.msra.mxu0 %v784
      %917 = vmatpush.bf16.msra.mxu0 %v782
      %918 = vmatmul.bf16.gmra.mxu0 %v522
      %v919 = vpop.f32.mrf.mxu0
      %v920 = vadd.f32 0.0, %v919
      %v921 = vpop.f32.mrf.mxu0
      %v922 = vadd.f32 0.0, %v921
      %923 = vdwg.mxu0
      %924 = vmatpush.bf16.msra.mxu0 %v812
      %925 = vmatpush.bf16.msra.mxu0 %v810
      %926 = vmatpush.bf16.msra.mxu0 %v808
      %927 = vmatpush.bf16.msra.mxu0 %v806
      %928 = vmatpush.bf16.msra.mxu0 %v804
      %929 = vmatpush.bf16.msra.mxu0 %v802
      %930 = vmatpush.bf16.msra.mxu0 %v800
      %931 = vmatpush.bf16.msra.mxu0 %v798
      %932 = vmatmul.bf16.gmra.mxu0 %v523
      %v933 = vpop.f32.mrf.mxu0
      %v934 = vadd.f32 %v920, %v933
      %v935 = vpop.f32.mrf.mxu0
      %v936 = vadd.f32 %v922, %v935
      %937 = vdwg.mxu0
      %938 = vmatpush.bf16.msra.mxu0 %v828
      %939 = vmatpush.bf16.msra.mxu0 %v826
      %940 = vmatpush.bf16.msra.mxu0 %v824
      %941 = vmatpush.bf16.msra.mxu0 %v822
      %942 = vmatpush.bf16.msra.mxu0 %v820
      %943 = vmatpush.bf16.msra.mxu0 %v818
      %944 = vmatpush.bf16.msra.mxu0 %v816
      %945 = vmatpush.bf16.msra.mxu0 %v814
      %946 = vmatmul.bf16.gmra.mxu0 %v524
      %v947 = vpop.f32.mrf.mxu0
      %v948 = vadd.f32 %v934, %v947
      %v949 = vpop.f32.mrf.mxu0
      %v950 = vadd.f32 %v936, %v949
      %951 = vdwg.mxu0
      %952 = vmatpush.bf16.msra.mxu0 %v844
      %953 = vmatpush.bf16.msra.mxu0 %v842
      %954 = vmatpush.bf16.msra.mxu0 %v840
      %955 = vmatpush.bf16.msra.mxu0 %v838
      %956 = vmatpush.bf16.msra.mxu0 %v836
      %957 = vmatpush.bf16.msra.mxu0 %v834
      %958 = vmatpush.bf16.msra.mxu0 %v832
      %959 = vmatpush.bf16.msra.mxu0 %v830
      %960 = vmatmul.bf16.gmra.mxu0 %v525
      %v961 = vpop.f32.mrf.mxu0
      %v962 = vadd.f32 %v948, %v961
      %v963 = vpop.f32.mrf.mxu0
      %v964 = vadd.f32 %v950, %v963
      %965 = vdwg.mxu0
      %966 = vmatpush.bf16.msra.mxu0 %v797
      %967 = vmatpush.bf16.msra.mxu0 %v795
      %968 = vmatpush.bf16.msra.mxu0 %v793
      %969 = vmatpush.bf16.msra.mxu0 %v791
      %970 = vmatpush.bf16.msra.mxu0 %v789
      %971 = vmatpush.bf16.msra.mxu0 %v787
      %972 = vmatpush.bf16.msra.mxu0 %v785
      %973 = vmatpush.bf16.msra.mxu0 %v783
      %974 = vmatmul.bf16.gmra.mxu0 %v522
      %v975 = vpop.f32.mrf.mxu0
      %v976 = vadd.f32 0.0, %v975
      %v977 = vpop.f32.mrf.mxu0
      %v978 = vadd.f32 0.0, %v977
      %979 = vdwg.mxu0
      %980 = vmatpush.bf16.msra.mxu0 %v813
      %981 = vmatpush.bf16.msra.mxu0 %v811
      %982 = vmatpush.bf16.msra.mxu0 %v809
      %983 = vmatpush.bf16.msra.mxu0 %v807
      %984 = vmatpush.bf16.msra.mxu0 %v805
      %985 = vmatpush.bf16.msra.mxu0 %v803
      %986 = vmatpush.bf16.msra.mxu0 %v801
      %987 = vmatpush.bf16.msra.mxu0 %v799
      %988 = vmatmul.bf16.gmra.mxu0 %v523
      %v989 = vpop.f32.mrf.mxu0
      %v990 = vadd.f32 %v976, %v989
      %v991 = vpop.f32.mrf.mxu0
      %v992 = vadd.f32 %v978, %v991
      %993 = vdwg.mxu0
      %994 = vmatpush.bf16.msra.mxu0 %v829
      %995 = vmatpush.bf16.msra.mxu0 %v827
      %996 = vmatpush.bf16.msra.mxu0 %v825
      %997 = vmatpush.bf16.msra.mxu0 %v823
      %998 = vmatpush.bf16.msra.mxu0 %v821
      %999 = vmatpush.bf16.msra.mxu0 %v819
      %1000 = vmatpush.bf16.msra.mxu0 %v817
      %1001 = vmatpush.bf16.msra.mxu0 %v815
      %1002 = vmatmul.bf16.gmra.mxu0 %v524
      %v1003 = vpop.f32.mrf.mxu0
      %v1004 = vadd.f32 %v990, %v1003
      %v1005 = vpop.f32.mrf.mxu0
      %v1006 = vadd.f32 %v992, %v1005
      %1007 = vdwg.mxu0
      %1008 = vmatpush.bf16.msra.mxu0 %v845
      %1009 = vmatpush.bf16.msra.mxu0 %v843
      %1010 = vmatpush.bf16.msra.mxu0 %v841
      %1011 = vmatpush.bf16.msra.mxu0 %v839
      %1012 = vmatpush.bf16.msra.mxu0 %v837
      %1013 = vmatpush.bf16.msra.mxu0 %v835
      %1014 = vmatpush.bf16.msra.mxu0 %v833
      %1015 = vmatpush.bf16.msra.mxu0 %v831
      %1016 = vmatmul.bf16.gmra.mxu0 %v525
      %v1017 = vpop.f32.mrf.mxu0
      %v1018 = vadd.f32 %v1004, %v1017
      %v1019 = vpop.f32.mrf.mxu0
      %v1020 = vadd.f32 %v1006, %v1019
      %1021 = vdwg.mxu0
      %v1022 = vpack.c.bf16 %v1018, %v962
      %v1023 = vpack.c.bf16 %v1020, %v964
      %v1024 = vld [vmem:[%s3] sm:$0x3]
      %1026 = vst [vmem:[#allocation1] ss:$9 sm:$0xff] %v1024
      %v1027 = vld [vmem:[#allocation1] sm:$0xff]
      %v1028 = vld [vmem:[#allocation1 + $0x9] sm:$0xff]
      %v1029 = vpack.i.b16 %v1027, %v1027
      %v1031 = vperm.slane %v1029, 0
      %v1032 = vpack.i.b16 %v1028, %v1028
      %v1034 = vperm.slane %v1032, 0
      %v1035 = vunpack.c.l.bf16 %v1022
      %v1036 = vunpack.c.h.bf16 %v1022
      %v1037 = vunpack.c.l.bf16 %v1023
      %v1038 = vunpack.c.h.bf16 %v1023
      %v1039 = vunpack.c.l.bf16 %v1031
      %v1040 = vunpack.c.l.bf16 %v1034
      %v1041 = vadd.f32 %v1035, %v1039
      %v1042 = vadd.f32 %v1036, %v1040
      %v1043 = vadd.f32 %v1037, %v1039
      %v1044 = vadd.f32 %v1038, %v1040
      %v1045 = vpack.c.bf16 %v1042, %v1041
      %v1046 = vpack.c.bf16 %v1044, %v1043
      %v1047 = vunpack.c.l.bf16 %v1045
      %v1048 = vunpack.c.h.bf16 %v1045
      %v1049 = vunpack.c.l.bf16 %v1046
      %v1050 = vunpack.c.h.bf16 %v1046
      %v1051 = vmul.f32 %v1047, 0.25
      %v1052 = vmul.f32 %v1048, 0.25
      %v1053 = vmul.f32 %v1049, 0.25
      %v1054 = vmul.f32 %v1050, 0.25
      %v1055 = vpack.c.bf16 %v1052, %v1051
      %v1056 = vpack.c.bf16 %v1054, %v1053
      %v1057 = vunpack.c.l.bf16 %v1055
      %v1058 = vunpack.c.h.bf16 %v1055
      %v1059 = vunpack.c.l.bf16 %v1056
      %v1060 = vunpack.c.h.bf16 %v1056
      %v1061 = vmax.f32 %v1047, %v1057
      %v1062 = vmax.f32 %v1048, %v1058
      %v1063 = vmax.f32 %v1049, %v1059
      %v1064 = vmax.f32 %v1050, %v1060
      %v1065 = vpack.c.bf16 %v1063, %v1061
      %v1066 = vpack.c.bf16 %v1064, %v1062
      %v1067 = vld [vmem:[%s4] sm:$0xf]
      %v1068 = vld [vmem:[%s4 + $0x4] sm:$0xf]
      %v1069 = vld [vmem:[%s4 + $0x8] sm:$0xf]
      %v1070 = vld [vmem:[%s4 + $0xc] sm:$0xf]
      %v1071 = vld [vmem:[%s4 + $0x10] sm:$0xf]
      %v1072 = vld [vmem:[%s4 + $0x14] sm:$0xf]
      %v1073 = vld [vmem:[%s4 + $0x18] sm:$0xf]
      %v1074 = vld [vmem:[%s4 + $0x1c] sm:$0xf]
      %v1075 = vld [vmem:[%s4 + $0x20] sm:$0xf]
      %v1076 = vld [vmem:[%s4 + $0x24] sm:$0xf]
      %v1077 = vld [vmem:[%s4 + $0x28] sm:$0xf]
      %v1078 = vld [vmem:[%s4 + $0x2c] sm:$0xf]
      %v1079 = vld [vmem:[%s4 + $0x30] sm:$0xf]
      %v1080 = vld [vmem:[%s4 + $0x34] sm:$0xf]
      %v1081 = vld [vmem:[%s4 + $0x38] sm:$0xf]
      %v1082 = vld [vmem:[%s4 + $0x3c] sm:$0xf]
      %v1083 = vld [vmem:[%s4 + $0x40] sm:$0xf]
      %v1084 = vld [vmem:[%s4 + $0x44] sm:$0xf]
      %v1085 = vld [vmem:[%s4 + $0x48] sm:$0xf]
      %v1086 = vld [vmem:[%s4 + $0x4c] sm:$0xf]
      %v1087 = vld [vmem:[%s4 + $0x50] sm:$0xf]
      %v1088 = vld [vmem:[%s4 + $0x54] sm:$0xf]
      %v1089 = vld [vmem:[%s4 + $0x58] sm:$0xf]
      %v1090 = vld [vmem:[%s4 + $0x5c] sm:$0xf]
      %v1091 = vld [vmem:[%s4 + $0x60] sm:$0xf]
      %v1092 = vld [vmem:[%s4 + $0x64] sm:$0xf]
      %v1093 = vld [vmem:[%s4 + $0x68] sm:$0xf]
      %v1094 = vld [vmem:[%s4 + $0x6c] sm:$0xf]
      %v1095 = vld [vmem:[%s4 + $0x70] sm:$0xf]
      %v1096 = vld [vmem:[%s4 + $0x74] sm:$0xf]
      %v1097 = vld [vmem:[%s4 + $0x78] sm:$0xf]
      %v1098 = vld [vmem:[%s4 + $0x7c] sm:$0xf]
      %v1131 = vunpack.c.l.b16 %v1067
      %v1132 = vunpack.c.l.b16 %v1068
      %v1133 = vunpack.c.l.b16 %v1069
      %v1134 = vunpack.c.l.b16 %v1070
      %v1135 = vunpack.c.l.b16 %v1071
      %v1136 = vunpack.c.l.b16 %v1072
      %v1137 = vunpack.c.l.b16 %v1073
      %v1138 = vunpack.c.l.b16 %v1074
      %v1139 = vunpack.c.l.b16 %v1075
      %v1140 = vunpack.c.l.b16 %v1076
      %v1141 = vunpack.c.l.b16 %v1077
      %v1142 = vunpack.c.l.b16 %v1078
      %v1143 = vunpack.c.l.b16 %v1079
      %v1144 = vunpack.c.l.b16 %v1080
      %v1145 = vunpack.c.l.b16 %v1081
      %v1146 = vunpack.c.l.b16 %v1082
      %v1147 = vunpack.c.l.b16 %v1083
      %v1148 = vunpack.c.l.b16 %v1084
      %v1149 = vunpack.c.l.b16 %v1085
      %v1150 = vunpack.c.l.b16 %v1086
      %v1151 = vunpack.c.l.b16 %v1087
      %v1152 = vunpack.c.l.b16 %v1088
      %v1153 = vunpack.c.l.b16 %v1089
      %v1154 = vunpack.c.l.b16 %v1090
      %v1155 = vunpack.c.l.b16 %v1091
      %v1156 = vunpack.c.l.b16 %v1092
      %v1157 = vunpack.c.l.b16 %v1093
      %v1158 = vunpack.c.l.b16 %v1094
      %v1159 = vunpack.c.l.b16 %v1095
      %v1160 = vunpack.c.l.b16 %v1096
      %v1161 = vunpack.c.l.b16 %v1097
      %v1162 = vunpack.c.l.b16 %v1098
      %v1163 = vpack.c.b16 %v1132, %v1131
      %v1164 = vpack.c.b16 %v1134, %v1133
      %v1165 = vpack.c.b16 %v1136, %v1135
      %v1166 = vpack.c.b16 %v1138, %v1137
      %v1167 = vpack.c.b16 %v1140, %v1139
      %v1168 = vpack.c.b16 %v1142, %v1141
      %v1169 = vpack.c.b16 %v1144, %v1143
      %v1170 = vpack.c.b16 %v1146, %v1145
      %v1171 = vpack.c.b16 %v1148, %v1147
      %v1172 = vpack.c.b16 %v1150, %v1149
      %v1173 = vpack.c.b16 %v1152, %v1151
      %v1174 = vpack.c.b16 %v1154, %v1153
      %v1175 = vpack.c.b16 %v1156, %v1155
      %v1176 = vpack.c.b16 %v1158, %v1157
      %v1177 = vpack.c.b16 %v1160, %v1159
      %v1178 = vpack.c.b16 %v1162, %v1161
      %1195 = vmatpush.bf16.msra.mxu0 %v1170
      %1196 = vmatpush.bf16.msra.mxu0 %v1169
      %1197 = vmatpush.bf16.msra.mxu0 %v1168
      %1198 = vmatpush.bf16.msra.mxu0 %v1167
      %1199 = vmatpush.bf16.msra.mxu0 %v1166
      %1200 = vmatpush.bf16.msra.mxu0 %v1165
      %1201 = vmatpush.bf16.msra.mxu0 %v1164
      %1202 = vmatpush.bf16.msra.mxu0 %v1163
      %1203 = vmatmul.bf16.gmra.mxu0 %v1065
      %v1204 = vpop.f32.mrf.mxu0
      %v1205 = vadd.f32 0.0, %v1204
      %v1206 = vpop.f32.mrf.mxu0
      %v1207 = vadd.f32 0.0, %v1206
      %1208 = vdwg.mxu0
      %1209 = vmatpush.bf16.msra.mxu0 %v1178
      %1210 = vmatpush.bf16.msra.mxu0 %v1177
      %1211 = vmatpush.bf16.msra.mxu0 %v1176
      %1212 = vmatpush.bf16.msra.mxu0 %v1175
      %1213 = vmatpush.bf16.msra.mxu0 %v1174
      %1214 = vmatpush.bf16.msra.mxu0 %v1173
      %1215 = vmatpush.bf16.msra.mxu0 %v1172
      %1216 = vmatpush.bf16.msra.mxu0 %v1171
      %1217 = vmatmul.bf16.gmra.mxu0 %v1066
      %v1218 = vpop.f32.mrf.mxu0
      %v1219 = vadd.f32 %v1205, %v1218
      %v1220 = vpop.f32.mrf.mxu0
      %v1221 = vadd.f32 %v1207, %v1220
      %1222 = vdwg.mxu0
      %v1223 = vpack.c.bf16 %v1219, %v1219
      %v1224 = vpack.c.bf16 %v1221, %v1221
      %v1225 = vld [vmem:[%s5] sm:$0x1]
      %v1227 = vpack.i.b16 %v1225, %v1225
      %v1229 = vperm.slane %v1227, 0
      %v1230 = vunpack.c.l.bf16 %v1223
      %v1231 = vunpack.c.l.bf16 %v1224
      %v1232 = vunpack.c.l.bf16 %v1229
      %v1233 = vadd.f32 %v1230, %v1232
      %v1234 = vadd.f32 %v1231, %v1232
      %v1235 = vpack.c.bf16 %v1233, %v1233
      %v1236 = vpack.c.bf16 %v1234, %v1234
      %v1237 = vunpack.c.l.bf16 %v1235
      %v1238 = vunpack.c.l.bf16 %v1236
      %v1239 = vmul.f32 %v1237, 0.25
      %v1240 = vmul.f32 %v1238, 0.25
      %v1241 = vpack.c.bf16 %v1239, %v1239
      %v1242 = vpack.c.bf16 %v1240, %v1240
      %v1243 = vunpack.c.l.bf16 %v1241
      %v1244 = vunpack.c.l.bf16 %v1242
      %v1245 = vmax.f32 %v1237, %v1243
      %v1246 = vmax.f32 %v1238, %v1244
      %v1247 = vpack.c.bf16 %v1246, %v1245
      %v1248 = vld [vmem:[%s6] sm:$0xff]
      %v1250 = vunpack.c.l.b16 %v1248
      %v1251 = vunpack.c.h.b16 %v1248
      %v1252 = vpack.c.b16 %v1250, %v1250
      %v1253 = vpack.c.b16 %v1251, %v1251
      %vm1254 = vcmask 64512
      %v1256 = vsel %vm1254, %v1247, 0
      %vm1258 = vcmask 1043456
      %v1260 = vsel %vm1258, %v1252, 0
      %v1263 = vsel %vm1258, %v1253, 0
      %1265 = vmatpush.bf16.msra.mxu0 0
      %1266 = vmatpush.bf16.msra.mxu0 0
      %1267 = vmatpush.bf16.msra.mxu0 0
      %1268 = vmatpush.bf16.msra.mxu0 0
      %1269 = vmatpush.bf16.msra.mxu0 0
      %1270 = vmatpush.bf16.msra.mxu0 0
      %1271 = vmatpush.bf16.msra.mxu0 0
      %1272 = vmatpush.bf16.msra.mxu0 %v1260
      %1273 = vmatmul.bf16.gmra.mxu0 %v1256
      %v1274 = vpop.f32.mrf.mxu0
      %v1275 = vadd.f32 0.0, %v1274
      %v1276 = vpop.f32.mrf.mxu0
      %v1277 = vadd.f32 0.0, %v1276
      %1278 = vdwg.mxu0
      %1279 = vmatpush.bf16.msra.mxu0 0
      %1280 = vmatpush.bf16.msra.mxu0 0
      %1281 = vmatpush.bf16.msra.mxu0 0
      %1282 = vmatpush.bf16.msra.mxu0 0
      %1283 = vmatpush.bf16.msra.mxu0 0
      %1284 = vmatpush.bf16.msra.mxu0 0
      %1285 = vmatpush.bf16.msra.mxu0 0
      %1286 = vmatpush.bf16.msra.mxu0 %v1263
      %1287 = vmatmul.bf16.gmra.mxu0 %v1256
      %v1288 = vpop.f32.mrf.mxu0
      %v1289 = vadd.f32 0.0, %v1288
      %v1290 = vpop.f32.mrf.mxu0
      %v1291 = vadd.f32 0.0, %v1290
      %1292 = vdwg.mxu0
      %v1293 = vpack.c.bf16 %v1289, %v1275
      %v1294 = vpack.c.bf16 %v1291, %v1277
      %v1295 = vunpack.c.l.bf16 %v1293
      %v1296 = vunpack.c.h.bf16 %v1293
      %v1297 = vunpack.c.l.bf16 %v1294
      %v1298 = vunpack.c.h.bf16 %v1294
      %v1299 = vmul.f32 %v1295, 0.25
      %v1300 = vmul.f32 %v1296, 0.25
      %v1301 = vmul.f32 %v1297, 0.25
      %v1302 = vmul.f32 %v1298, 0.25
      %v1303 = vpack.c.bf16 %v1300, %v1299
      %v1304 = vpack.c.bf16 %v1302, %v1301
      %v1305 = vunpack.c.l.bf16 %v1303
      %v1306 = vunpack.c.h.bf16 %v1303
      %v1307 = vunpack.c.l.bf16 %v1304
      %v1308 = vunpack.c.h.bf16 %v1304
      %v1309 = vmax.f32 %v1295, %v1305
      %v1310 = vmax.f32 %v1296, %v1306
      %v1311 = vmax.f32 %v1297, %v1307
      %v1312 = vmax.f32 %v1298, %v1308
      %v1313 = vpack.c.bf16 %v1311, %v1309
      %v1314 = vpack.c.bf16 %v1312, %v1310
      %v1315 = vld [vmem:[%s7] sm:$0xf]
      %v1316 = vld [vmem:[%s7 + $0x4] sm:$0xf]
      %v1317 = vld [vmem:[%s7 + $0x8] sm:$0xf]
      %v1318 = vld [vmem:[%s7 + $0xc] sm:$0xf]
      %v1319 = vld [vmem:[%s7 + $0x10] sm:$0xf]
      %v1320 = vld [vmem:[%s7 + $0x14] sm:$0xf]
      %v1321 = vld [vmem:[%s7 + $0x18] sm:$0xf]
      %v1322 = vld [vmem:[%s7 + $0x1c] sm:$0xf]
      %v1323 = vld [vmem:[%s7 + $0x20] sm:$0xf]
      %v1324 = vld [vmem:[%s7 + $0x24] sm:$0xf]
      %v1325 = vld [vmem:[%s7 + $0x28] sm:$0xf]
      %v1326 = vld [vmem:[%s7 + $0x2c] sm:$0xf]
      %v1327 = vld [vmem:[%s7 + $0x30] sm:$0xf]
      %v1328 = vld [vmem:[%s7 + $0x34] sm:$0xf]
      %v1329 = vld [vmem:[%s7 + $0x38] sm:$0xf]
      %v1330 = vld [vmem:[%s7 + $0x3c] sm:$0xf]
      %v1331 = vld [vmem:[%s7 + $0x40] sm:$0xf]
      %v1332 = vld [vmem:[%s7 + $0x44] sm:$0xf]
      %v1333 = vld [vmem:[%s7 + $0x48] sm:$0xf]
      %v1334 = vld [vmem:[%s7 + $0x4c] sm:$0xf]
      %v1335 = vld [vmem:[%s7 + $0x50] sm:$0xf]
      %v1336 = vld [vmem:[%s7 + $0x54] sm:$0xf]
      %v1337 = vld [vmem:[%s7 + $0x58] sm:$0xf]
      %v1338 = vld [vmem:[%s7 + $0x5c] sm:$0xf]
      %v1339 = vld [vmem:[%s7 + $0x60] sm:$0xf]
      %v1340 = vld [vmem:[%s7 + $0x64] sm:$0xf]
      %v1341 = vld [vmem:[%s7 + $0x68] sm:$0xf]
      %v1342 = vld [vmem:[%s7 + $0x6c] sm:$0xf]
      %v1343 = vld [vmem:[%s7 + $0x70] sm:$0xf]
      %v1344 = vld [vmem:[%s7 + $0x74] sm:$0xf]
      %v1345 = vld [vmem:[%s7 + $0x78] sm:$0xf]
      %v1346 = vld [vmem:[%s7 + $0x7c] sm:$0xf]
      %v1379 = vunpack.c.l.b16 %v1315
      %v1380 = vunpack.c.l.b16 %v1316
      %v1381 = vunpack.c.l.b16 %v1317
      %v1382 = vunpack.c.l.b16 %v1318
      %v1383 = vunpack.c.l.b16 %v1319
      %v1384 = vunpack.c.l.b16 %v1320
      %v1385 = vunpack.c.l.b16 %v1321
      %v1386 = vunpack.c.l.b16 %v1322
      %v1387 = vunpack.c.l.b16 %v1323
      %v1388 = vunpack.c.l.b16 %v1324
      %v1389 = vunpack.c.l.b16 %v1325
      %v1390 = vunpack.c.l.b16 %v1326
      %v1391 = vunpack.c.l.b16 %v1327
      %v1392 = vunpack.c.l.b16 %v1328
      %v1393 = vunpack.c.l.b16 %v1329
      %v1394 = vunpack.c.l.b16 %v1330
      %v1395 = vunpack.c.l.b16 %v1331
      %v1396 = vunpack.c.l.b16 %v1332
      %v1397 = vunpack.c.l.b16 %v1333
      %v1398 = vunpack.c.l.b16 %v1334
      %v1399 = vunpack.c.l.b16 %v1335
      %v1400 = vunpack.c.l.b16 %v1336
      %v1401 = vunpack.c.l.b16 %v1337
      %v1402 = vunpack.c.l.b16 %v1338
      %v1403 = vunpack.c.l.b16 %v1339
      %v1404 = vunpack.c.l.b16 %v1340
      %v1405 = vunpack.c.l.b16 %v1341
      %v1406 = vunpack.c.l.b16 %v1342
      %v1407 = vunpack.c.l.b16 %v1343
      %v1408 = vunpack.c.l.b16 %v1344
      %v1409 = vunpack.c.l.b16 %v1345
      %v1410 = vunpack.c.l.b16 %v1346
      %v1411 = vpack.c.b16 %v1380, %v1379
      %v1412 = vpack.c.b16 %v1382, %v1381
      %v1413 = vpack.c.b16 %v1384, %v1383
      %v1414 = vpack.c.b16 %v1386, %v1385
      %v1415 = vpack.c.b16 %v1388, %v1387
      %v1416 = vpack.c.b16 %v1390, %v1389
      %v1417 = vpack.c.b16 %v1392, %v1391
      %v1418 = vpack.c.b16 %v1394, %v1393
      %v1419 = vpack.c.b16 %v1396, %v1395
      %v1420 = vpack.c.b16 %v1398, %v1397
      %v1421 = vpack.c.b16 %v1400, %v1399
      %v1422 = vpack.c.b16 %v1402, %v1401
      %v1423 = vpack.c.b16 %v1404, %v1403
      %v1424 = vpack.c.b16 %v1406, %v1405
      %v1425 = vpack.c.b16 %v1408, %v1407
      %v1426 = vpack.c.b16 %v1410, %v1409
      %1443 = vmatpush.bf16.msra.mxu0 %v1418
      %1444 = vmatpush.bf16.msra.mxu0 %v1417
      %1445 = vmatpush.bf16.msra.mxu0 %v1416
      %1446 = vmatpush.bf16.msra.mxu0 %v1415
      %1447 = vmatpush.bf16.msra.mxu0 %v1414
      %1448 = vmatpush.bf16.msra.mxu0 %v1413
      %1449 = vmatpush.bf16.msra.mxu0 %v1412
      %1450 = vmatpush.bf16.msra.mxu0 %v1411
      %1451 = vmatmul.bf16.gmra.mxu0 %v1313
      %v1452 = vpop.f32.mrf.mxu0
      %v1453 = vadd.f32 0.0, %v1452
      %v1454 = vpop.f32.mrf.mxu0
      %v1455 = vadd.f32 0.0, %v1454
      %1456 = vdwg.mxu0
      %1457 = vmatpush.bf16.msra.mxu0 %v1426
      %1458 = vmatpush.bf16.msra.mxu0 %v1425
      %1459 = vmatpush.bf16.msra.mxu0 %v1424
      %1460 = vmatpush.bf16.msra.mxu0 %v1423
      %1461 = vmatpush.bf16.msra.mxu0 %v1422
      %1462 = vmatpush.bf16.msra.mxu0 %v1421
      %1463 = vmatpush.bf16.msra.mxu0 %v1420
      %1464 = vmatpush.bf16.msra.mxu0 %v1419
      %1465 = vmatmul.bf16.gmra.mxu0 %v1314
      %v1466 = vpop.f32.mrf.mxu0
      %v1467 = vadd.f32 %v1453, %v1466
      %v1468 = vpop.f32.mrf.mxu0
      %v1469 = vadd.f32 %v1455, %v1468
      %1470 = vdwg.mxu0
      %v1471 = vpack.c.bf16 %v1467, %v1467
      %v1472 = vpack.c.bf16 %v1469, %v1469
      %v1473 = vld [vmem:[%s8] sm:$0x1]
      %v1475 = vpack.i.b16 %v1473, %v1473
      %v1477 = vperm.slane %v1475, 0
      %v1478 = vunpack.c.l.bf16 %v1471
      %v1479 = vunpack.c.l.bf16 %v1472
      %v1480 = vunpack.c.l.bf16 %v1477
      %v1481 = vadd.f32 %v1478, %v1480
      %v1482 = vadd.f32 %v1479, %v1480
      %v1483 = vpack.c.bf16 %v1481, %v1481
      %v1484 = vpack.c.bf16 %v1482, %v1482
      %v1485 = vunpack.c.l.bf16 %v1483
      %v1486 = vunpack.c.l.bf16 %v1484
      %v1487 = vmul.f32 %v1485, 0.25
      %v1488 = vmul.f32 %v1486, 0.25
      %v1489 = vpack.c.bf16 %v1487, %v1487
      %v1490 = vpack.c.bf16 %v1488, %v1488
      %v1491 = vunpack.c.l.bf16 %v1489
      %v1492 = vunpack.c.l.bf16 %v1490
      %v1493 = vmax.f32 %v1485, %v1491
      %v1494 = vmax.f32 %v1486, %v1492
      %v1495 = vpack.c.bf16 %v1494, %v1493
      %v1496 = vld [vmem:[%s9] sm:$0xf]
      %v1497 = vld [vmem:[%s9 + $0x4] sm:$0xf]
      %v1498 = vld [vmem:[%s9 + $0x8] sm:$0xf]
      %v1499 = vld [vmem:[%s9 + $0xc] sm:$0xf]
      %v1500 = vld [vmem:[%s9 + $0x10] sm:$0xf]
      %v1501 = vld [vmem:[%s9 + $0x14] sm:$0xf]
      %v1502 = vld [vmem:[%s9 + $0x18] sm:$0xf]
      %v1503 = vld [vmem:[%s9 + $0x1c] sm:$0xf]
      %v1504 = vld [vmem:[%s9 + $0x20] sm:$0xf]
      %v1505 = vld [vmem:[%s9 + $0x24] sm:$0xf]
      %v1506 = vld [vmem:[%s9 + $0x28] sm:$0xf]
      %v1507 = vld [vmem:[%s9 + $0x2c] sm:$0xf]
      %v1508 = vld [vmem:[%s9 + $0x30] sm:$0xf]
      %v1509 = vld [vmem:[%s9 + $0x34] sm:$0xf]
      %v1510 = vld [vmem:[%s9 + $0x38] sm:$0xf]
      %v1511 = vld [vmem:[%s9 + $0x3c] sm:$0xf]
      %v1528 = vunpack.c.l.b16 %v1496
      %v1529 = vunpack.c.l.b16 %v1497
      %v1530 = vunpack.c.l.b16 %v1498
      %v1531 = vunpack.c.l.b16 %v1499
      %v1532 = vunpack.c.l.b16 %v1500
      %v1533 = vunpack.c.l.b16 %v1501
      %v1534 = vunpack.c.l.b16 %v1502
      %v1535 = vunpack.c.l.b16 %v1503
      %v1536 = vunpack.c.l.b16 %v1504
      %v1537 = vunpack.c.l.b16 %v1505
      %v1538 = vunpack.c.l.b16 %v1506
      %v1539 = vunpack.c.l.b16 %v1507
      %v1540 = vunpack.c.l.b16 %v1508
      %v1541 = vunpack.c.l.b16 %v1509
      %v1542 = vunpack.c.l.b16 %v1510
      %v1543 = vunpack.c.l.b16 %v1511
      %v1544 = vpack.c.b16 %v1529, %v1528
      %v1545 = vpack.c.b16 %v1531, %v1530
      %v1546 = vpack.c.b16 %v1533, %v1532
      %v1547 = vpack.c.b16 %v1535, %v1534
      %v1548 = vpack.c.b16 %v1537, %v1536
      %v1549 = vpack.c.b16 %v1539, %v1538
      %v1550 = vpack.c.b16 %v1541, %v1540
      %v1551 = vpack.c.b16 %v1543, %v1542
      %1560 = vmatpush.bf16.msra.mxu0 %v1551
      %1561 = vmatpush.bf16.msra.mxu0 %v1550
      %1562 = vmatpush.bf16.msra.mxu0 %v1549
      %1563 = vmatpush.bf16.msra.mxu0 %v1548
      %1564 = vmatpush.bf16.msra.mxu0 %v1547
      %1565 = vmatpush.bf16.msra.mxu0 %v1546
      %1566 = vmatpush.bf16.msra.mxu0 %v1545
      %1567 = vmatpush.bf16.msra.mxu0 %v1544
      %1568 = vmatmul.bf16.gmra.mxu0 %v1495
      %v1569 = vpop.f32.mrf.mxu0
      %v1570 = vadd.f32 0.0, %v1569
      %v1571 = vpop.f32.mrf.mxu0
      %v1572 = vadd.f32 0.0, %v1571
      %1573 = vdwg.mxu0
      %v1574 = vpack.c.bf16 %v1570, %v1570
      %v1575 = vpack.c.bf16 %v1572, %v1572
      %v1576 = vld [vmem:[%s10] sm:$0x1]
      %v1578 = vpack.i.b16 %v1576, %v1576
      %v1580 = vperm.slane %v1578, 0
      %v1581 = vunpack.c.l.bf16 %v1574
      %v1582 = vunpack.c.l.bf16 %v1575
      %v1583 = vunpack.c.l.bf16 %v1580
      %v1584 = vadd.f32 %v1581, %v1583
      %v1585 = vadd.f32 %v1582, %v1583
      %v1586 = vpack.c.bf16 %v1584, %v1584
      %v1587 = vpack.c.bf16 %v1585, %v1585
      %v1588 = vunpack.c.l.bf16 %v1586
      %v1589 = vunpack.c.l.bf16 %v1587
      %v1590 = vmul.f32 %v1588, 0.25
      %v1591 = vmul.f32 %v1589, 0.25
      %v1592 = vpack.c.bf16 %v1590, %v1590
      %v1593 = vpack.c.bf16 %v1591, %v1591
      %v1594 = vunpack.c.l.bf16 %v1592
      %v1595 = vunpack.c.l.bf16 %v1593
      %v1596 = vmax.f32 %v1588, %v1594
      %v1597 = vmax.f32 %v1589, %v1595
      %v1598 = vpack.c.bf16 %v1596, %v1596
      %v1599 = vpack.c.bf16 %v1597, %v1597
      %1600 = vst [vmem:[%s388] sm:$0xf] %v1598
      %1601 = vst [vmem:[%s388 + $0x4] sm:$0xf] %v1599
      %s1602 = smul.u32 2, %s22
      %p1603 = scmp.lt.s32.totalorder %s1602, 3
      %s1604 = scalar_select %p1603, %s1602, 3
      %s1605 = smul.addr %s1604, 4
      %s1606 = scalar_lea.vmem %s11, %s1605
      // Predicated region
      $region65: #{node_o_forward.1} parent=63 // pred_check
        %p1607 = pneg %p276
      $region66: #{node_o_forward.1} parent=63 // pred_check_branch
        %1609 = sbr.rel (%p1607) target = $region68
      $region67: #{node_o_forward.1} parent=63 // pred_region
        %s1610 = smul.u32 2, %s22
      $region68: #{node_o_forward.1} parent=63 // pred_fallthru
        _
    $region64: #{node_o_forward.1} parent=5 // pred_fallthru
      _
    %p1611 = scmp.le.s32.totalorder 2, %s17
    // Predicated region
    $region69: #{node_o_forward.1} parent=5 // pred_check
      %p1612 = pneg %p1611
    $region70: #{node_o_forward.1} parent=5 // pred_check_branch
      %1614 = sbr.rel (%p1612) target = $region72
    $region71: #{node_o_forward.1} parent=5 // pred_region
      %s1615 = ssub.s32 %s17, 2
      // Predicated region
      $region73: #{node_o_forward.1} parent=71 // pred_check
        %p1616 = pneg %p282
      $region74: #{node_o_forward.1} parent=71 // pred_check_branch
        %1618 = sbr.rel (%p1616) target = $region76
      $region75: #{node_o_forward.1} parent=71 // pred_region
        %s1619 = smul.u32 2, %s23
        %p1620 = scmp.lt.s32.totalorder %s1619, 3
        %s1621 = scalar_select %p1620, %s1619, 3
        %s1622 = smul.addr %s1621, 4
        %s1623 = scalar_lea.vmem %s11, %s1622
      $region76: #{node_o_forward.1} parent=71 // pred_fallthru
        _
    $region72: #{node_o_forward.1} parent=5 // pred_fallthru
      _
  $region6: #{node_o_forward.1} parent=0 // loop_footer
    %s21 = sadd.s32 1, %s17
  $region7: #{node_o_forward.1} parent=0 // loop_footer_branch
    %16 = sbr.rel target = $region3
  $region8: #{node_o_forward.1} parent=0 // loop_exit
    _

</llo_original>
